<compile_context>
chip_gen: v6e
topology: v6e:2x2x1
jax: 0.10.0
libtpu: 0.0.40
codegen_flags: <defaults>
</compile_context>

<pallas_src>
import jax
import jax.numpy as jnp
from jax.experimental import pallas as pl
from jax.experimental.pallas import tpu as pltpu

K = 5          # depthwise kernel size
PAD = 2        # F.pad([2]*4)


# --------------------------- kernel -------------------------------------------
def _make_kernel(N, H, W, C, eps):
    NH, WC = N * H, W * C
    inv_count = 1.0 / float(N * H * W)

    def lane_fold(v):
        # Circular all-reduce over the W groups of each channel along the lane
        # axis: result[:, w*C + c] = sum_w' v[:, w'*C + c].
        # log2(W) pltpu.roll's (XLU) + adds on a single-vreg row; the doubling
        # fold is direction-agnostic. W must be a power of two.
        shift = C
        while shift < WC:
            v = v + pltpu.roll(v, shift, axis=1)
            shift *= 2
        return v

    def kernel(x_ref, g0_ref, b0_ref, m0_ref, g1_ref, b1_ref, m1_ref, o_ref):
        # Per-row validity of each vertical tap of the pad-2 5x5 conv:
        # row r = n*H + h may read row r + dh only if 0 <= h + dh < H
        # (stays inside the same image of the stacked batch / zero padding).
        h = jax.lax.broadcasted_iota(jnp.int32, (NH, 1), 0) % H
        masks = [
            ((h + (kh - PAD) >= 0) & (h + (kh - PAD) < H)).astype(jnp.float32)
            for kh in range(K)
        ]

        def stage(x, g, b, mv):
            # ---- training-mode BatchNorm (biased variance) + ReLU ------------
            # Sublane reduce first (32 rows -> 1), then lane-fold the (1, WC)
            # rows; sum and sum-of-squares chains are independent.
            s1 = lane_fold(jnp.sum(x, axis=0, keepdims=True))        # (1, WC)
            s2 = lane_fold(jnp.sum(x * x, axis=0, keepdims=True))    # (1, WC)
            mean = s1 * inv_count
            var = s2 * inv_count - mean * mean                       # one-pass var
            scale = g * jax.lax.rsqrt(var + eps)                     # (1, WC)
            shift_row = b - mean * scale
            y = jnp.maximum(x * scale + shift_row, 0.0)              # (NH, WC)

            # ---- pad-2 depthwise 5x5 + pointwise 1x1 as ONE MXU matmul -------
            #   out[r] = sum_kh valid(r,kh) * y[r + kh - PAD] @ M_kh
            #          = [Y_0 | ... | Y_4] @ vstack(M_0..M_4)
            parts = []
            for kh in range(K):
                dh = kh - PAD
                if dh == 0:
                    parts.append(y)
                else:
                    # jnp.roll(y, -dh)[r] = y[(r + dh) mod NH]; the mask zeroes
                    # every wrapped / cross-image / padding row.
                    parts.append(jnp.roll(y, -dh, axis=0) * masks[kh])
            ycat = jnp.concatenate(parts, axis=1)                    # (NH, K*WC)
            return jnp.dot(ycat, mv, preferred_element_type=jnp.float32)

        y1 = stage(x_ref[...], g0_ref[...], b0_ref[...], m0_ref[...])
        o_ref[...] = stage(y1, g1_ref[...], b1_ref[...], m1_ref[...])  # (32,128) full-lane store

    return kernel


# --------------------------- wrapper-side parameter prep ----------------------
def _prep_stage_mix(dw_kkc, pw_cico, W):
    """vstack of the K per-kh mix matrices, shape (K*W*C, W*C):
        M_kh[w_in*C + ci, w_out*C + co] = dw[kh, w_in - w_out + PAD, ci] * pw[ci, co]
    (zero when w_in - w_out + PAD is outside [0, K)).  Folds the 5 W-taps, the
    depthwise coefficients, the W zero-padding and the pointwise 1x1 mix."""
    _, _, C = dw_kkc.shape
    w_idx = jnp.arange(W)
    kw = w_idx[:, None] - w_idx[None, :] + PAD                     # (W_in, W_out)
    valid = ((kw >= 0) & (kw < K)).astype(jnp.float32)[..., None]  # (W, W, 1)
    kw_c = jnp.clip(kw, 0, K - 1)
    mats = []
    for kh in range(K):
        dw_sel = dw_kkc[kh][kw_c] * valid                          # (W, W, C) = dw[kh, kw, ci]
        m = jnp.einsum("abi,ij->aibj", dw_sel, pw_cico)            # (W, C_in, W, C_out)
        mats.append(m.reshape(W * C, W * C))
    return jnp.concatenate(mats, axis=0)                           # (K*WC, WC)


def sep5_forward(x_nchw, params, eps=1e-5):
    """Full Sep5 forward (reduction=False).  Input/output are NCHW like PyTorch."""
    N, C, H, W = x_nchw.shape
    assert (W & (W - 1)) == 0, "lane-fold reduction assumes W is a power of two"
    NH, WC = N * H, W * C

    m0 = _prep_stage_mix(params["dw0"], params["pw0"], W)          # (K*WC, WC) f32
    m1 = _prep_stage_mix(params["dw1"], params["pw1"], W)
    g0 = jnp.tile(params["gamma0"], W).reshape(1, WC)
    b0 = jnp.tile(params["beta0"], W).reshape(1, WC)
    g1 = jnp.tile(params["gamma1"], W).reshape(1, WC)
    b1 = jnp.tile(params["beta1"], W).reshape(1, WC)

    # single layout change at each end: NCHW -> lane-dense (N*H, W*C) slab
    x2d = jnp.transpose(x_nchw, (0, 2, 3, 1)).reshape(NH, WC)

    flops = 2 * 2 * NH * (K * WC) * WC                             # 2 stages, one K=640 matmul each
    bytes_accessed = 4 * (2 * NH * WC + 2 * K * WC * WC + 4 * WC)

    out2d = pl.pallas_call(
        _make_kernel(N, H, W, C, eps),
        out_shape=jax.ShapeDtypeStruct((NH, WC), jnp.float32),
        cost_estimate=pl.CostEstimate(
            flops=flops, transcendentals=2 * WC, bytes_accessed=bytes_accessed),
    )(x2d, g0, b0, m0, g1, b1, m1)

    return jnp.transpose(out2d.reshape(N, H, W, C), (0, 3, 1, 2))


# --------------------------- pure-JAX reference --------------------------------
def _ref_stage(x, gamma, beta, dw_kkc, pw_cico, eps=1e-5):
    mean = jnp.mean(x, axis=(0, 1, 2))
    var = jnp.mean((x - mean) ** 2, axis=(0, 1, 2))
    y = jnp.maximum((x - mean) / jnp.sqrt(var + eps) * gamma + beta, 0.0)
    yp = jnp.pad(y, ((0, 0), (PAD, PAD), (PAD, PAD), (0, 0)))
    C = x.shape[-1]
    rhs = dw_kkc.reshape(K, K, 1, C)  # HWIO, in/group = 1
    z = jax.lax.conv_general_dilated(
        yp, rhs, (1, 1), "VALID",
        dimension_numbers=("NHWC", "HWIO", "NHWC"), feature_group_count=C)
    return jnp.einsum("nhwc,cd->nhwd", z, pw_cico)


def _ref_forward(x_nchw, p):
    x = jnp.transpose(x_nchw, (0, 2, 3, 1))
    x = _ref_stage(x, p["gamma0"], p["beta0"], p["dw0"], p["pw0"])
    x = _ref_stage(x, p["gamma1"], p["beta1"], p["dw1"], p["pw1"])
    return jnp.transpose(x, (0, 3, 1, 2))


if __name__ == "__main__":
    N, C, H, W = 2, 8, 16, 16   # in_channels=8, reduction=False
    key = jax.random.PRNGKey(0)
    ks = jax.random.split(key, 9)

    x = jax.random.normal(ks[0], (N, C, H, W), jnp.float32)

    # Deterministic synthetic parameters (shapes match the PyTorch module):
    #   Sep_5_bn_*   : gamma/beta (C,)
    #   Sep_5_{0,1}  : depthwise weight (C,1,5,5) -> stored as (5,5,C)
    #   Sep_5_ident_*: pointwise weight (C,C,1,1) -> stored as (C_in, C_out)
    params = {
        "gamma0": 1.0 + 0.1 * jax.random.normal(ks[1], (C,), jnp.float32),
        "beta0": 0.1 * jax.random.normal(ks[2], (C,), jnp.float32),
        "dw0": 0.2 * jax.random.normal(ks[3], (K, K, C), jnp.float32),
        "pw0": 0.2 * jax.random.normal(ks[4], (C, C), jnp.float32),
        "gamma1": 1.0 + 0.1 * jax.random.normal(ks[5], (C,), jnp.float32),
        "beta1": 0.1 * jax.random.normal(ks[6], (C,), jnp.float32),
        "dw1": 0.2 * jax.random.normal(ks[7], (K, K, C), jnp.float32),
        "pw1": 0.2 * jax.random.normal(ks[8], (C, C), jnp.float32),
    }

    fwd = jax.jit(sep5_forward)
    out = jax.block_until_ready(fwd(x, params))
    ref = jax.block_until_ready(_ref_forward(x, params))

    assert out.shape == (N, C, H, W), out.shape
    assert jnp.all(jnp.isfinite(out))
    assert jnp.allclose(out, ref, rtol=1e-4, atol=1e-4), float(jnp.max(jnp.abs(out - ref)))
    print("KERNEL_OK")
</pallas_src>

<mosaic_0001>
module attributes {stable_mosaic.version = 11 : i64} {
  func.func @kernel(%arg0: memref<32x128xf32, #tpu.memory_space<vmem>>, %arg1: memref<1x128xf32, #tpu.memory_space<vmem>>, %arg2: memref<1x128xf32, #tpu.memory_space<vmem>>, %arg3: memref<640x128xf32, #tpu.memory_space<vmem>>, %arg4: memref<1x128xf32, #tpu.memory_space<vmem>>, %arg5: memref<1x128xf32, #tpu.memory_space<vmem>>, %arg6: memref<640x128xf32, #tpu.memory_space<vmem>>, %arg7: memref<32x128xf32, #tpu.memory_space<vmem>>) attributes {dimension_semantics = [], scalar_prefetch = 0 : i64, scratch_operands = 0 : i64, tpu.core_type = #tpu.core_type<tc>} {
    %0 = tpu.iota {dimensions = array<i32: 0>} : vector<32x1xi32>
    %c16_i32 = arith.constant 16 : i32
    %c0_i32 = arith.constant 0 : i32
    %1 = arith.cmpi eq, %c16_i32, %c0_i32 : i32
    %c1_i32 = arith.constant 1 : i32
    %2 = arith.select %1, %c1_i32, %c16_i32 : i32
    %3 = vector.broadcast %2 : i32 to vector<32x1xi32>
    %4 = arith.remsi %0, %3 : vector<32x1xi32>
    %c0_i32_0 = arith.constant 0 : i32
    %5 = vector.broadcast %c0_i32_0 : i32 to vector<32x1xi32>
    %6 = arith.cmpi ne, %4, %5 : vector<32x1xi32>
    %c0_i32_1 = arith.constant 0 : i32
    %7 = vector.broadcast %c0_i32_1 : i32 to vector<32x1xi32>
    %8 = arith.cmpi slt, %4, %7 : vector<32x1xi32>
    %c0_i32_2 = arith.constant 0 : i32
    %9 = arith.cmpi slt, %2, %c0_i32_2 : i32
    %10 = vector.broadcast %9 : i1 to vector<32x1xi1>
    %11 = vector.broadcast %10 : vector<32x1xi1> to vector<32x1xi1>
    %12 = arith.xori %8, %11 : vector<32x1xi1>
    %13 = arith.andi %12, %6 : vector<32x1xi1>
    %14 = vector.broadcast %2 : i32 to vector<32x1xi32>
    %15 = arith.addi %4, %14 : vector<32x1xi32>
    %16 = arith.select %13, %15, %4 : vector<32x1xi1>, vector<32x1xi32>
    %c-2_i32 = arith.constant -2 : i32
    %17 = vector.broadcast %c-2_i32 : i32 to vector<32x1xi32>
    %18 = arith.addi %16, %17 : vector<32x1xi32>
    %c0_i32_3 = arith.constant 0 : i32
    %19 = vector.broadcast %c0_i32_3 : i32 to vector<32x1xi32>
    %20 = arith.cmpi sge, %18, %19 : vector<32x1xi32>
    %c-2_i32_4 = arith.constant -2 : i32
    %21 = vector.broadcast %c-2_i32_4 : i32 to vector<32x1xi32>
    %22 = arith.addi %16, %21 : vector<32x1xi32>
    %c16_i32_5 = arith.constant 16 : i32
    %23 = vector.broadcast %c16_i32_5 : i32 to vector<32x1xi32>
    %24 = arith.cmpi slt, %22, %23 : vector<32x1xi32>
    %25 = arith.andi %20, %24 : vector<32x1xi1>
    %26 = arith.extui %25 : vector<32x1xi1> to vector<32x1xi32>
    %27 = arith.sitofp %26 : vector<32x1xi32> to vector<32x1xf32>
    %c-1_i32 = arith.constant -1 : i32
    %28 = vector.broadcast %c-1_i32 : i32 to vector<32x1xi32>
    %29 = arith.addi %16, %28 : vector<32x1xi32>
    %c0_i32_6 = arith.constant 0 : i32
    %30 = vector.broadcast %c0_i32_6 : i32 to vector<32x1xi32>
    %31 = arith.cmpi sge, %29, %30 : vector<32x1xi32>
    %c-1_i32_7 = arith.constant -1 : i32
    %32 = vector.broadcast %c-1_i32_7 : i32 to vector<32x1xi32>
    %33 = arith.addi %16, %32 : vector<32x1xi32>
    %c16_i32_8 = arith.constant 16 : i32
    %34 = vector.broadcast %c16_i32_8 : i32 to vector<32x1xi32>
    %35 = arith.cmpi slt, %33, %34 : vector<32x1xi32>
    %36 = arith.andi %31, %35 : vector<32x1xi1>
    %37 = arith.extui %36 : vector<32x1xi1> to vector<32x1xi32>
    %38 = arith.sitofp %37 : vector<32x1xi32> to vector<32x1xf32>
    %c1_i32_9 = arith.constant 1 : i32
    %39 = vector.broadcast %c1_i32_9 : i32 to vector<32x1xi32>
    %40 = arith.addi %16, %39 : vector<32x1xi32>
    %c0_i32_10 = arith.constant 0 : i32
    %41 = vector.broadcast %c0_i32_10 : i32 to vector<32x1xi32>
    %42 = arith.cmpi sge, %40, %41 : vector<32x1xi32>
    %c1_i32_11 = arith.constant 1 : i32
    %43 = vector.broadcast %c1_i32_11 : i32 to vector<32x1xi32>
    %44 = arith.addi %16, %43 : vector<32x1xi32>
    %c16_i32_12 = arith.constant 16 : i32
    %45 = vector.broadcast %c16_i32_12 : i32 to vector<32x1xi32>
    %46 = arith.cmpi slt, %44, %45 : vector<32x1xi32>
    %47 = arith.andi %42, %46 : vector<32x1xi1>
    %48 = arith.extui %47 : vector<32x1xi1> to vector<32x1xi32>
    %49 = arith.sitofp %48 : vector<32x1xi32> to vector<32x1xf32>
    %c2_i32 = arith.constant 2 : i32
    %50 = vector.broadcast %c2_i32 : i32 to vector<32x1xi32>
    %51 = arith.addi %16, %50 : vector<32x1xi32>
    %c0_i32_13 = arith.constant 0 : i32
    %52 = vector.broadcast %c0_i32_13 : i32 to vector<32x1xi32>
    %53 = arith.cmpi sge, %51, %52 : vector<32x1xi32>
    %c2_i32_14 = arith.constant 2 : i32
    %54 = vector.broadcast %c2_i32_14 : i32 to vector<32x1xi32>
    %55 = arith.addi %16, %54 : vector<32x1xi32>
    %c16_i32_15 = arith.constant 16 : i32
    %56 = vector.broadcast %c16_i32_15 : i32 to vector<32x1xi32>
    %57 = arith.cmpi slt, %55, %56 : vector<32x1xi32>
    %58 = arith.andi %53, %57 : vector<32x1xi1>
    %59 = arith.extui %58 : vector<32x1xi1> to vector<32x1xi32>
    %60 = arith.sitofp %59 : vector<32x1xi32> to vector<32x1xf32>
    %c0 = arith.constant 0 : index
    %c0_16 = arith.constant 0 : index
    %61 = vector.load %arg0[%c0, %c0_16] : memref<32x128xf32, #tpu.memory_space<vmem>>, vector<32x128xf32>
    %c0_17 = arith.constant 0 : index
    %c0_18 = arith.constant 0 : index
    %62 = vector.load %arg1[%c0_17, %c0_18] : memref<1x128xf32, #tpu.memory_space<vmem>>, vector<1x128xf32>
    %c0_19 = arith.constant 0 : index
    %c0_20 = arith.constant 0 : index
    %63 = vector.load %arg2[%c0_19, %c0_20] : memref<1x128xf32, #tpu.memory_space<vmem>>, vector<1x128xf32>
    %c0_21 = arith.constant 0 : index
    %c0_22 = arith.constant 0 : index
    %64 = vector.load %arg3[%c0_21, %c0_22] : memref<640x128xf32, #tpu.memory_space<vmem>>, vector<640x128xf32>
    %cst = arith.constant dense<0.000000e+00> : vector<128xf32>
    %65 = vector.multi_reduction <add>, %61, %cst [0] : vector<32x128xf32> to vector<128xf32>
    %66 = vector.shape_cast %65 : vector<128xf32> to vector<1x128xf32>
    %c8_i32 = arith.constant 8 : i32
    %67 = tpu.dynamic_rotate %66 by %c8_i32 dim 1 : vector<1x128xf32>, i32 -> vector<1x128xf32>
    %68 = arith.addf %66, %67 : vector<1x128xf32>
    %c16_i32_23 = arith.constant 16 : i32
    %69 = tpu.dynamic_rotate %68 by %c16_i32_23 dim 1 : vector<1x128xf32>, i32 -> vector<1x128xf32>
    %70 = arith.addf %68, %69 : vector<1x128xf32>
    %c32_i32 = arith.constant 32 : i32
    %71 = tpu.dynamic_rotate %70 by %c32_i32 dim 1 : vector<1x128xf32>, i32 -> vector<1x128xf32>
    %72 = arith.addf %70, %71 : vector<1x128xf32>
    %c64_i32 = arith.constant 64 : i32
    %73 = tpu.dynamic_rotate %72 by %c64_i32 dim 1 : vector<1x128xf32>, i32 -> vector<1x128xf32>
    %74 = arith.addf %72, %73 : vector<1x128xf32>
    %75 = arith.mulf %61, %61 : vector<32x128xf32>
    %cst_24 = arith.constant dense<0.000000e+00> : vector<128xf32>
    %76 = vector.multi_reduction <add>, %75, %cst_24 [0] : vector<32x128xf32> to vector<128xf32>
    %77 = vector.shape_cast %76 : vector<128xf32> to vector<1x128xf32>
    %c8_i32_25 = arith.constant 8 : i32
    %78 = tpu.dynamic_rotate %77 by %c8_i32_25 dim 1 : vector<1x128xf32>, i32 -> vector<1x128xf32>
    %79 = arith.addf %77, %78 : vector<1x128xf32>
    %c16_i32_26 = arith.constant 16 : i32
    %80 = tpu.dynamic_rotate %79 by %c16_i32_26 dim 1 : vector<1x128xf32>, i32 -> vector<1x128xf32>
    %81 = arith.addf %79, %80 : vector<1x128xf32>
    %c32_i32_27 = arith.constant 32 : i32
    %82 = tpu.dynamic_rotate %81 by %c32_i32_27 dim 1 : vector<1x128xf32>, i32 -> vector<1x128xf32>
    %83 = arith.addf %81, %82 : vector<1x128xf32>
    %c64_i32_28 = arith.constant 64 : i32
    %84 = tpu.dynamic_rotate %83 by %c64_i32_28 dim 1 : vector<1x128xf32>, i32 -> vector<1x128xf32>
    %85 = arith.addf %83, %84 : vector<1x128xf32>
    %cst_29 = arith.constant 0.001953125 : f32
    %86 = vector.broadcast %cst_29 : f32 to vector<1x128xf32>
    %87 = arith.mulf %74, %86 : vector<1x128xf32>
    %cst_30 = arith.constant 0.001953125 : f32
    %88 = vector.broadcast %cst_30 : f32 to vector<1x128xf32>
    %89 = arith.mulf %85, %88 : vector<1x128xf32>
    %90 = arith.mulf %87, %87 : vector<1x128xf32>
    %91 = arith.subf %89, %90 : vector<1x128xf32>
    %cst_31 = arith.constant 9.99999974E-6 : f32
    %92 = vector.broadcast %cst_31 : f32 to vector<1x128xf32>
    %93 = arith.addf %91, %92 : vector<1x128xf32>
    %94 = math.rsqrt %93 : vector<1x128xf32>
    %95 = arith.mulf %62, %94 : vector<1x128xf32>
    %96 = arith.mulf %87, %95 : vector<1x128xf32>
    %97 = arith.subf %63, %96 : vector<1x128xf32>
    %98 = vector.broadcast %95 : vector<1x128xf32> to vector<32x128xf32>
    %99 = arith.mulf %61, %98 : vector<32x128xf32>
    %100 = vector.broadcast %97 : vector<1x128xf32> to vector<32x128xf32>
    %101 = arith.addf %99, %100 : vector<32x128xf32>
    %cst_32 = arith.constant 0.000000e+00 : f32
    %102 = vector.broadcast %cst_32 : f32 to vector<32x128xf32>
    %103 = arith.maximumf %101, %102 : vector<32x128xf32>
    %104 = vector.extract_strided_slice %103 {offsets = [30, 0], sizes = [2, 128], strides = [1, 1]} : vector<32x128xf32> to vector<2x128xf32>
    %105 = vector.extract_strided_slice %103 {offsets = [0, 0], sizes = [30, 128], strides = [1, 1]} : vector<32x128xf32> to vector<30x128xf32>
    %106 = tpu.concatenate %104, %105 in 0 : vector<2x128xf32>, vector<30x128xf32> -> vector<32x128xf32>
    %107 = vector.broadcast %27 : vector<32x1xf32> to vector<32x128xf32>
    %108 = arith.mulf %106, %107 : vector<32x128xf32>
    %109 = vector.extract_strided_slice %103 {offsets = [31, 0], sizes = [1, 128], strides = [1, 1]} : vector<32x128xf32> to vector<1x128xf32>
    %110 = vector.extract_strided_slice %103 {offsets = [0, 0], sizes = [31, 128], strides = [1, 1]} : vector<32x128xf32> to vector<31x128xf32>
    %111 = tpu.concatenate %109, %110 in 0 : vector<1x128xf32>, vector<31x128xf32> -> vector<32x128xf32>
    %112 = vector.broadcast %38 : vector<32x1xf32> to vector<32x128xf32>
    %113 = arith.mulf %111, %112 : vector<32x128xf32>
    %114 = vector.extract_strided_slice %103 {offsets = [1, 0], sizes = [31, 128], strides = [1, 1]} : vector<32x128xf32> to vector<31x128xf32>
    %115 = vector.extract_strided_slice %103 {offsets = [0, 0], sizes = [1, 128], strides = [1, 1]} : vector<32x128xf32> to vector<1x128xf32>
    %116 = tpu.concatenate %114, %115 in 0 : vector<31x128xf32>, vector<1x128xf32> -> vector<32x128xf32>
    %117 = vector.broadcast %49 : vector<32x1xf32> to vector<32x128xf32>
    %118 = arith.mulf %116, %117 : vector<32x128xf32>
    %119 = vector.extract_strided_slice %103 {offsets = [2, 0], sizes = [30, 128], strides = [1, 1]} : vector<32x128xf32> to vector<30x128xf32>
    %120 = vector.extract_strided_slice %103 {offsets = [0, 0], sizes = [2, 128], strides = [1, 1]} : vector<32x128xf32> to vector<2x128xf32>
    %121 = tpu.concatenate %119, %120 in 0 : vector<30x128xf32>, vector<2x128xf32> -> vector<32x128xf32>
    %122 = vector.broadcast %60 : vector<32x1xf32> to vector<32x128xf32>
    %123 = arith.mulf %121, %122 : vector<32x128xf32>
    %124 = tpu.concatenate %108, %113, %103, %118, %123 in 1 : vector<32x128xf32>, vector<32x128xf32>, vector<32x128xf32>, vector<32x128xf32>, vector<32x128xf32> -> vector<32x640xf32>
    %cst_33 = arith.constant dense<0.000000e+00> : vector<32x128xf32>
    %125 = tpu.matmul %124, %64, %cst_33 {dimension_numbers = #tpu.dot_dimension_numbers<[1], [0], [0], [1], [0, 0, 1, 1], [], []>} : vector<32x640xf32>, vector<640x128xf32>, vector<32x128xf32> -> vector<32x128xf32>
    %c0_34 = arith.constant 0 : index
    %c0_35 = arith.constant 0 : index
    %126 = vector.load %arg4[%c0_34, %c0_35] : memref<1x128xf32, #tpu.memory_space<vmem>>, vector<1x128xf32>
    %c0_36 = arith.constant 0 : index
    %c0_37 = arith.constant 0 : index
    %127 = vector.load %arg5[%c0_36, %c0_37] : memref<1x128xf32, #tpu.memory_space<vmem>>, vector<1x128xf32>
    %c0_38 = arith.constant 0 : index
    %c0_39 = arith.constant 0 : index
    %128 = vector.load %arg6[%c0_38, %c0_39] : memref<640x128xf32, #tpu.memory_space<vmem>>, vector<640x128xf32>
    %cst_40 = arith.constant dense<0.000000e+00> : vector<128xf32>
    %129 = vector.multi_reduction <add>, %125, %cst_40 [0] : vector<32x128xf32> to vector<128xf32>
    %130 = vector.shape_cast %129 : vector<128xf32> to vector<1x128xf32>
    %c8_i32_41 = arith.constant 8 : i32
    %131 = tpu.dynamic_rotate %130 by %c8_i32_41 dim 1 : vector<1x128xf32>, i32 -> vector<1x128xf32>
    %132 = arith.addf %130, %131 : vector<1x128xf32>
    %c16_i32_42 = arith.constant 16 : i32
    %133 = tpu.dynamic_rotate %132 by %c16_i32_42 dim 1 : vector<1x128xf32>, i32 -> vector<1x128xf32>
    %134 = arith.addf %132, %133 : vector<1x128xf32>
    %c32_i32_43 = arith.constant 32 : i32
    %135 = tpu.dynamic_rotate %134 by %c32_i32_43 dim 1 : vector<1x128xf32>, i32 -> vector<1x128xf32>
    %136 = arith.addf %134, %135 : vector<1x128xf32>
    %c64_i32_44 = arith.constant 64 : i32
    %137 = tpu.dynamic_rotate %136 by %c64_i32_44 dim 1 : vector<1x128xf32>, i32 -> vector<1x128xf32>
    %138 = arith.addf %136, %137 : vector<1x128xf32>
    %139 = arith.mulf %125, %125 : vector<32x128xf32>
    %cst_45 = arith.constant dense<0.000000e+00> : vector<128xf32>
    %140 = vector.multi_reduction <add>, %139, %cst_45 [0] : vector<32x128xf32> to vector<128xf32>
    %141 = vector.shape_cast %140 : vector<128xf32> to vector<1x128xf32>
    %c8_i32_46 = arith.constant 8 : i32
    %142 = tpu.dynamic_rotate %141 by %c8_i32_46 dim 1 : vector<1x128xf32>, i32 -> vector<1x128xf32>
    %143 = arith.addf %141, %142 : vector<1x128xf32>
    %c16_i32_47 = arith.constant 16 : i32
    %144 = tpu.dynamic_rotate %143 by %c16_i32_47 dim 1 : vector<1x128xf32>, i32 -> vector<1x128xf32>
    %145 = arith.addf %143, %144 : vector<1x128xf32>
    %c32_i32_48 = arith.constant 32 : i32
    %146 = tpu.dynamic_rotate %145 by %c32_i32_48 dim 1 : vector<1x128xf32>, i32 -> vector<1x128xf32>
    %147 = arith.addf %145, %146 : vector<1x128xf32>
    %c64_i32_49 = arith.constant 64 : i32
    %148 = tpu.dynamic_rotate %147 by %c64_i32_49 dim 1 : vector<1x128xf32>, i32 -> vector<1x128xf32>
    %149 = arith.addf %147, %148 : vector<1x128xf32>
    %cst_50 = arith.constant 0.001953125 : f32
    %150 = vector.broadcast %cst_50 : f32 to vector<1x128xf32>
    %151 = arith.mulf %138, %150 : vector<1x128xf32>
    %cst_51 = arith.constant 0.001953125 : f32
    %152 = vector.broadcast %cst_51 : f32 to vector<1x128xf32>
    %153 = arith.mulf %149, %152 : vector<1x128xf32>
    %154 = arith.mulf %151, %151 : vector<1x128xf32>
    %155 = arith.subf %153, %154 : vector<1x128xf32>
    %cst_52 = arith.constant 9.99999974E-6 : f32
    %156 = vector.broadcast %cst_52 : f32 to vector<1x128xf32>
    %157 = arith.addf %155, %156 : vector<1x128xf32>
    %158 = math.rsqrt %157 : vector<1x128xf32>
    %159 = arith.mulf %126, %158 : vector<1x128xf32>
    %160 = arith.mulf %151, %159 : vector<1x128xf32>
    %161 = arith.subf %127, %160 : vector<1x128xf32>
    %162 = vector.broadcast %159 : vector<1x128xf32> to vector<32x128xf32>
    %163 = arith.mulf %125, %162 : vector<32x128xf32>
    %164 = vector.broadcast %161 : vector<1x128xf32> to vector<32x128xf32>
    %165 = arith.addf %163, %164 : vector<32x128xf32>
    %cst_53 = arith.constant 0.000000e+00 : f32
    %166 = vector.broadcast %cst_53 : f32 to vector<32x128xf32>
    %167 = arith.maximumf %165, %166 : vector<32x128xf32>
    %168 = vector.extract_strided_slice %167 {offsets = [30, 0], sizes = [2, 128], strides = [1, 1]} : vector<32x128xf32> to vector<2x128xf32>
    %169 = vector.extract_strided_slice %167 {offsets = [0, 0], sizes = [30, 128], strides = [1, 1]} : vector<32x128xf32> to vector<30x128xf32>
    %170 = tpu.concatenate %168, %169 in 0 : vector<2x128xf32>, vector<30x128xf32> -> vector<32x128xf32>
    %171 = vector.broadcast %27 : vector<32x1xf32> to vector<32x128xf32>
    %172 = arith.mulf %170, %171 : vector<32x128xf32>
    %173 = vector.extract_strided_slice %167 {offsets = [31, 0], sizes = [1, 128], strides = [1, 1]} : vector<32x128xf32> to vector<1x128xf32>
    %174 = vector.extract_strided_slice %167 {offsets = [0, 0], sizes = [31, 128], strides = [1, 1]} : vector<32x128xf32> to vector<31x128xf32>
    %175 = tpu.concatenate %173, %174 in 0 : vector<1x128xf32>, vector<31x128xf32> -> vector<32x128xf32>
    %176 = vector.broadcast %38 : vector<32x1xf32> to vector<32x128xf32>
    %177 = arith.mulf %175, %176 : vector<32x128xf32>
    %178 = vector.extract_strided_slice %167 {offsets = [1, 0], sizes = [31, 128], strides = [1, 1]} : vector<32x128xf32> to vector<31x128xf32>
    %179 = vector.extract_strided_slice %167 {offsets = [0, 0], sizes = [1, 128], strides = [1, 1]} : vector<32x128xf32> to vector<1x128xf32>
    %180 = tpu.concatenate %178, %179 in 0 : vector<31x128xf32>, vector<1x128xf32> -> vector<32x128xf32>
    %181 = vector.broadcast %49 : vector<32x1xf32> to vector<32x128xf32>
    %182 = arith.mulf %180, %181 : vector<32x128xf32>
    %183 = vector.extract_strided_slice %167 {offsets = [2, 0], sizes = [30, 128], strides = [1, 1]} : vector<32x128xf32> to vector<30x128xf32>
    %184 = vector.extract_strided_slice %167 {offsets = [0, 0], sizes = [2, 128], strides = [1, 1]} : vector<32x128xf32> to vector<2x128xf32>
    %185 = tpu.concatenate %183, %184 in 0 : vector<30x128xf32>, vector<2x128xf32> -> vector<32x128xf32>
    %186 = vector.broadcast %60 : vector<32x1xf32> to vector<32x128xf32>
    %187 = arith.mulf %185, %186 : vector<32x128xf32>
    %188 = tpu.concatenate %172, %177, %167, %182, %187 in 1 : vector<32x128xf32>, vector<32x128xf32>, vector<32x128xf32>, vector<32x128xf32>, vector<32x128xf32> -> vector<32x640xf32>
    %cst_54 = arith.constant dense<0.000000e+00> : vector<32x128xf32>
    %189 = tpu.matmul %188, %128, %cst_54 {dimension_numbers = #tpu.dot_dimension_numbers<[1], [0], [0], [1], [0, 0, 1, 1], [], []>} : vector<32x640xf32>, vector<640x128xf32>, vector<32x128xf32> -> vector<32x128xf32>
    %c0_55 = arith.constant 0 : index
    %c0_56 = arith.constant 0 : index
    %190 = vector.load %arg7[%c0_55, %c0_56] : memref<32x128xf32, #tpu.memory_space<vmem>>, vector<32x128xf32>
    tpu.vector_store %arg7[%c0_55, %c0_56], %189 {strides = array<i32>} : memref<32x128xf32, #tpu.memory_space<vmem>>, vector<32x128xf32>,
    return
  }
}

</mosaic_0001>

<llo_original>
// kernel: tile.28
$region0: #{tile.28}
  #allocation0 [shape = 's32[1]{0}', space=sflag, size = 0x4, scoped, tag = 'scoped memory for tile.28']
  %s0 = inlined_call_operand.vmem [shape: f32[8], index: 0, kind: input, shape index: {}]
  %s1 = inlined_call_operand.vmem [shape: f32[16,8], index: 1, kind: output, shape index: {}]
  // Predicated region
  $region2: #{tile.28} parent=0 // pred_check
    _
  $region3: #{tile.28} parent=0 // pred_check_branch
    %3 = sbr.rel (0) target = $region5
  $region4: #{tile.28} parent=0 // pred_region
    _
  $region5: #{tile.28} parent=0 // pred_fallthru
    _
  %v4 = vld [vmem:[%s0] ss:$0 sm:$0xff]
  %5 = vst [vmem:[%s1] sm:$0xff] %v4
  %s6 = scalar_lea.vmem %s1, 8
  %7 = vst [vmem:[%s6] sm:$0xff] %v4

// kernel: tile.29
$region0: #{tile.29}
  %s0 = inlined_call_operand.vmem [shape: f32[16,8], index: 0, kind: input, shape index: {}]
  %s1 = inlined_call_operand.vmem [shape: f32[1,128], index: 1, kind: output, shape index: {}]
  $region1: #{tile.29} parent=0
    #allocation0 [shape = 'u8[4096]{0}', space=vmem, size = 0x1000, scoped, tag = 'scoped mem for output reshape']
    %v2 = vld [vmem:[%s0] sm:$0x1]
    %vm3 = vcmask 64512
    %4 = vst.msk [vmem:[#allocation0] sm:$0x1] %vm3, %v2
    %s5 = scalar_lea.vmem %s0, 15
    %v6 = vld [vmem:[%s5] sm:$0x1]
    %7 = vrot.lane.b32.xlu0 %v6, 120
    %v8 = vpop.permute.xlu0 %7
    %vm9 = vcmask 1048512
    %10 = vst.msk [vmem:[#allocation0] sm:$0x1] %vm9, %v8
    %s11 = scalar_lea.vmem %s0, 14
    %v12 = vld [vmem:[%s11] sm:$0x1]
    %13 = vrot.lane.b32.xlu0 %v12, 112
    %v14 = vpop.permute.xlu0 %13
    %vm15 = vcmask 982912
    %16 = vst.msk [vmem:[#allocation0] sm:$0x1] %vm15, %v14
    %s17 = scalar_lea.vmem %s0, 13
    %v18 = vld [vmem:[%s17] sm:$0x1]
    %19 = vrot.lane.b32.xlu0 %v18, 104
    %v20 = vpop.permute.xlu0 %19
    %vm21 = vcmask 917312
    %22 = vst.msk [vmem:[#allocation0] sm:$0x1] %vm21, %v20
    %s23 = scalar_lea.vmem %s0, 12
    %v24 = vld [vmem:[%s23] sm:$0x1]
    %25 = vrot.lane.b32.xlu0 %v24, 96
    %v26 = vpop.permute.xlu0 %25
    %vm27 = vcmask 851712
    %28 = vst.msk [vmem:[#allocation0] sm:$0x1] %vm27, %v26
    %s29 = scalar_lea.vmem %s0, 11
    %v30 = vld [vmem:[%s29] sm:$0x1]
    %31 = vrot.lane.b32.xlu0 %v30, 88
    %v32 = vpop.permute.xlu0 %31
    %vm33 = vcmask 786112
    %34 = vst.msk [vmem:[#allocation0] sm:$0x1] %vm33, %v32
    %s35 = scalar_lea.vmem %s0, 10
    %v36 = vld [vmem:[%s35] sm:$0x1]
    %37 = vrot.lane.b32.xlu0 %v36, 80
    %v38 = vpop.permute.xlu0 %37
    %vm39 = vcmask 720512
    %40 = vst.msk [vmem:[#allocation0] sm:$0x1] %vm39, %v38
    %s41 = scalar_lea.vmem %s0, 9
    %v42 = vld [vmem:[%s41] sm:$0x1]
    %43 = vrot.lane.b32.xlu0 %v42, 72
    %v44 = vpop.permute.xlu0 %43
    %vm45 = vcmask 654912
    %46 = vst.msk [vmem:[#allocation0] sm:$0x1] %vm45, %v44
    %s47 = scalar_lea.vmem %s0, 8
    %v48 = vld [vmem:[%s47] sm:$0x1]
    %49 = vrot.lane.b32.xlu0 %v48, 64
    %v50 = vpop.permute.xlu0 %49
    %vm51 = vcmask 589312
    %52 = vst.msk [vmem:[#allocation0] sm:$0x1] %vm51, %v50
    %s53 = scalar_lea.vmem %s0, 7
    %v54 = vld [vmem:[%s53] sm:$0x1]
    %55 = vrot.lane.b32.xlu0 %v54, 56
    %v56 = vpop.permute.xlu0 %55
    %vm57 = vcmask 523712
    %58 = vst.msk [vmem:[#allocation0] sm:$0x1] %vm57, %v56
    %s59 = scalar_lea.vmem %s0, 6
    %v60 = vld [vmem:[%s59] sm:$0x1]
    %61 = vrot.lane.b32.xlu0 %v60, 48
    %v62 = vpop.permute.xlu0 %61
    %vm63 = vcmask 458112
    %64 = vst.msk [vmem:[#allocation0] sm:$0x1] %vm63, %v62
    %s65 = scalar_lea.vmem %s0, 5
    %v66 = vld [vmem:[%s65] sm:$0x1]
    %67 = vrot.lane.b32.xlu0 %v66, 40
    %v68 = vpop.permute.xlu0 %67
    %vm69 = vcmask 392512
    %70 = vst.msk [vmem:[#allocation0] sm:$0x1] %vm69, %v68
    %s71 = scalar_lea.vmem %s0, 4
    %v72 = vld [vmem:[%s71] sm:$0x1]
    %73 = vrot.lane.b32.xlu0 %v72, 32
    %v74 = vpop.permute.xlu0 %73
    %vm75 = vcmask 326912
    %76 = vst.msk [vmem:[#allocation0] sm:$0x1] %vm75, %v74
    %s77 = scalar_lea.vmem %s0, 3
    %v78 = vld [vmem:[%s77] sm:$0x1]
    %79 = vrot.lane.b32.xlu0 %v78, 24
    %v80 = vpop.permute.xlu0 %79
    %vm81 = vcmask 261312
    %82 = vst.msk [vmem:[#allocation0] sm:$0x1] %vm81, %v80
    %s83 = scalar_lea.vmem %s0, 2
    %v84 = vld [vmem:[%s83] sm:$0x1]
    %85 = vrot.lane.b32.xlu0 %v84, 16
    %v86 = vpop.permute.xlu0 %85
    %vm87 = vcmask 195712
    %88 = vst.msk [vmem:[#allocation0] sm:$0x1] %vm87, %v86
    %s89 = scalar_lea.vmem %s0, 1
    %v90 = vld [vmem:[%s89] sm:$0x1]
    %91 = vrot.lane.b32.xlu0 %v90, 8
    %v92 = vpop.permute.xlu0 %91
    %vm93 = vcmask 130112
    %94 = vst.msk [vmem:[#allocation0] sm:$0x1] %vm93, %v92
    %s96 = sshll.u32 1, 1
    %s97 = ssub.s32 %s96, 1
    %v99 = vld [vmem:[#allocation0] sm:%s97]
    %s100 = sshll.u32 1, 1
    %s101 = ssub.s32 %s100, 1
    %102 = vst [vmem:[%s1] sm:%s101] %v99

// kernel: sep5_forward.1
$region0: #{sep5_forward.1}
  #allocation0 [shape = 'u32[]', space=smem, size = 0x4, offset = 0x4, fixed_abs, tag = 'smem constant byte address 0x4 - core index']
  #allocation1 [shape = 'u32[144,128]{1,0:T(1,128)}', space=vmem, size = 0x12000, scoped, tag = 'internal scratch']
  %s0 = inlined_call_operand.vmem [shape: f32[32,128], index: 0, kind: input, shape index: {}]
  %s1 = inlined_call_operand.vmem [shape: f32[1,128], index: 1, kind: input, shape index: {}]
  %s2 = inlined_call_operand.vmem [shape: f32[1,128], index: 2, kind: input, shape index: {}]
  %s3 = inlined_call_operand.vmem [shape: f32[640,128], index: 3, kind: input, shape index: {}]
  %s4 = inlined_call_operand.vmem [shape: f32[1,128], index: 4, kind: input, shape index: {}]
  %s5 = inlined_call_operand.vmem [shape: f32[1,128], index: 5, kind: input, shape index: {}]
  %s6 = inlined_call_operand.vmem [shape: f32[640,128], index: 6, kind: input, shape index: {}]
  %s7 = inlined_call_operand.vmem [shape: f32[32,128], index: 7, kind: output, shape index: {}]
  %s8 = sld [smem:[#allocation0]]
  $region38: #{sep5_forward.1} parent=0
    _
  %s10 = ssub.s32 1, %s8
  %s11 = scalar_select 0, %s10, %s8
  // Predicated region
  $region2: #{sep5_forward.1} parent=0 // pred_check
    _
  $region3: #{sep5_forward.1} parent=0 // pred_check_branch
    %13 = sbr.rel (0) target = $region5
  $region4: #{sep5_forward.1} parent=0 // pred_region
    _
  $region5: #{sep5_forward.1} parent=0 // pred_fallthru
    _
  // Predicated region
  $region6: #{sep5_forward.1} parent=0 // pred_check
    _
  $region7: #{sep5_forward.1} parent=0 // pred_check_branch
    %15 = sbr.rel (0) target = $region9
  $region8: #{sep5_forward.1} parent=0 // pred_region
    _
  $region9: #{sep5_forward.1} parent=0 // pred_fallthru
    _
  // Predicated region
  $region10: #{sep5_forward.1} parent=0 // pred_check
    _
  $region11: #{sep5_forward.1} parent=0 // pred_check_branch
    %17 = sbr.rel (0) target = $region13
  $region12: #{sep5_forward.1} parent=0 // pred_region
    _
  $region13: #{sep5_forward.1} parent=0 // pred_fallthru
    _
  // Predicated region
  $region14: #{sep5_forward.1} parent=0 // pred_check
    _
  $region15: #{sep5_forward.1} parent=0 // pred_check_branch
    %19 = sbr.rel (0) target = $region17
  $region16: #{sep5_forward.1} parent=0 // pred_region
    _
  $region17: #{sep5_forward.1} parent=0 // pred_fallthru
    _
  // Predicated region
  $region18: #{sep5_forward.1} parent=0 // pred_check
    _
  $region19: #{sep5_forward.1} parent=0 // pred_check_branch
    %21 = sbr.rel (0) target = $region21
  $region20: #{sep5_forward.1} parent=0 // pred_region
    _
  $region21: #{sep5_forward.1} parent=0 // pred_fallthru
    _
  // Predicated region
  $region22: #{sep5_forward.1} parent=0 // pred_check
    _
  $region23: #{sep5_forward.1} parent=0 // pred_check_branch
    %23 = sbr.rel (0) target = $region25
  $region24: #{sep5_forward.1} parent=0 // pred_region
    _
  $region25: #{sep5_forward.1} parent=0 // pred_fallthru
    _
  // Predicated region
  $region26: #{sep5_forward.1} parent=0 // pred_check
    _
  $region27: #{sep5_forward.1} parent=0 // pred_check_branch
    %25 = sbr.rel (0) target = $region29
  $region28: #{sep5_forward.1} parent=0 // pred_region
    _
  $region29: #{sep5_forward.1} parent=0 // pred_fallthru
    _
  %v26 = vlaneseq
  %v27 = vshrl.u32 %v26, 7
  %v28 = vadd.s32 %v27, 8
  %v29 = vadd.s32 %v27, 16
  %v30 = vadd.s32 %v27, 24
  %vm31 = vcmp.lt.s32.totalorder %v27, 0
  %v32 = vsub.s32 0, %v27
  %v33 = vsel %vm31, %v32, %v27
  %v34 = vshrl.u32 %v33, 4
  %v35 = vand.u32 %v33, 15
  %v36 = vsub.s32 0, %v35
  %v37 = vsel %vm31, %v36, %v35
  %vm38 = vcmp.lt.s32.totalorder %v28, 0
  %v39 = vsub.s32 0, %v28
  %v40 = vsel %vm38, %v39, %v28
  %v41 = vshrl.u32 %v40, 4
  %v42 = vand.u32 %v40, 15
  %v43 = vsub.s32 0, %v42
  %v44 = vsel %vm38, %v43, %v42
  %vm45 = vcmp.lt.s32.totalorder %v29, 0
  %v46 = vsub.s32 0, %v29
  %v47 = vsel %vm45, %v46, %v29
  %v48 = vshrl.u32 %v47, 4
  %v49 = vand.u32 %v47, 15
  %v50 = vsub.s32 0, %v49
  %v51 = vsel %vm45, %v50, %v49
  %vm52 = vcmp.lt.s32.totalorder %v30, 0
  %v53 = vsub.s32 0, %v30
  %v54 = vsel %vm52, %v53, %v30
  %v55 = vshrl.u32 %v54, 4
  %v56 = vand.u32 %v54, 15
  %v57 = vsub.s32 0, %v56
  %v58 = vsel %vm52, %v57, %v56
  %vm59 = vcmp.ne.s32.totalorder %v37, 0
  %vm60 = vcmp.ne.s32.totalorder %v44, 0
  %vm61 = vcmp.ne.s32.totalorder %v51, 0
  %vm62 = vcmp.ne.s32.totalorder %v58, 0
  %vm63 = vcmp.lt.s32.totalorder %v37, 0
  %vm64 = vcmp.lt.s32.totalorder %v44, 0
  %vm65 = vcmp.lt.s32.totalorder %v51, 0
  %vm66 = vcmp.lt.s32.totalorder %v58, 0
  %vm67 = vmand %vm63, %vm59
  %vm68 = vmand %vm64, %vm60
  %vm69 = vmand %vm65, %vm61
  %vm70 = vmand %vm66, %vm62
  %v71 = vadd.s32 %v37, 16
  %v72 = vadd.s32 %v44, 16
  %v73 = vadd.s32 %v51, 16
  %v74 = vadd.s32 %v58, 16
  %v75 = vsel %vm67, %v71, %v37
  %v76 = vsel %vm68, %v72, %v44
  %v77 = vsel %vm69, %v73, %v51
  %v78 = vsel %vm70, %v74, %v58
  %v79 = vadd.s32 %v75, 4294967294
  %v80 = vadd.s32 %v76, 4294967294
  %v81 = vadd.s32 %v77, 4294967294
  %v82 = vadd.s32 %v78, 4294967294
  %vm83 = vcmp.ge.s32.totalorder %v79, 0
  %vm84 = vcmp.ge.s32.totalorder %v80, 0
  %vm85 = vcmp.ge.s32.totalorder %v81, 0
  %vm86 = vcmp.ge.s32.totalorder %v82, 0
  %vm87 = vcmp.lt.s32.totalorder %v79, 16
  %vm88 = vcmp.lt.s32.totalorder %v80, 16
  %vm89 = vcmp.lt.s32.totalorder %v81, 16
  %vm90 = vcmp.lt.s32.totalorder %v82, 16
  %vm91 = vmand %vm83, %vm87
  %vm92 = vmand %vm84, %vm88
  %vm93 = vmand %vm85, %vm89
  %vm94 = vmand %vm86, %vm90
  %v95 = vsel %vm91, 1, 0
  %v96 = vsel %vm92, 1, 0
  %v97 = vsel %vm93, 1, 0
  %v98 = vsel %vm94, 1, 0
  %v99 = vcvt.s32.f32 %v95
  %v100 = vcvt.s32.f32 %v96
  %v101 = vcvt.s32.f32 %v97
  %v102 = vcvt.s32.f32 %v98
  %v103 = vadd.s32 %v75, 4294967295
  %v104 = vadd.s32 %v76, 4294967295
  %v105 = vadd.s32 %v77, 4294967295
  %v106 = vadd.s32 %v78, 4294967295
  %vm107 = vcmp.ge.s32.totalorder %v103, 0
  %vm108 = vcmp.ge.s32.totalorder %v104, 0
  %vm109 = vcmp.ge.s32.totalorder %v105, 0
  %vm110 = vcmp.ge.s32.totalorder %v106, 0
  %vm111 = vcmp.lt.s32.totalorder %v103, 16
  %vm112 = vcmp.lt.s32.totalorder %v104, 16
  %vm113 = vcmp.lt.s32.totalorder %v105, 16
  %vm114 = vcmp.lt.s32.totalorder %v106, 16
  %vm115 = vmand %vm107, %vm111
  %vm116 = vmand %vm108, %vm112
  %vm117 = vmand %vm109, %vm113
  %vm118 = vmand %vm110, %vm114
  %v119 = vsel %vm115, 1, 0
  %v120 = vsel %vm116, 1, 0
  %v121 = vsel %vm117, 1, 0
  %v122 = vsel %vm118, 1, 0
  %v123 = vcvt.s32.f32 %v119
  %v124 = vcvt.s32.f32 %v120
  %v125 = vcvt.s32.f32 %v121
  %v126 = vcvt.s32.f32 %v122
  %v127 = vadd.s32 %v75, 1
  %v128 = vadd.s32 %v76, 1
  %v129 = vadd.s32 %v77, 1
  %v130 = vadd.s32 %v78, 1
  %vm131 = vcmp.ge.s32.totalorder %v127, 0
  %vm132 = vcmp.ge.s32.totalorder %v128, 0
  %vm133 = vcmp.ge.s32.totalorder %v129, 0
  %vm134 = vcmp.ge.s32.totalorder %v130, 0
  %vm135 = vcmp.lt.s32.totalorder %v127, 16
  %vm136 = vcmp.lt.s32.totalorder %v128, 16
  %vm137 = vcmp.lt.s32.totalorder %v129, 16
  %vm138 = vcmp.lt.s32.totalorder %v130, 16
  %vm139 = vmand %vm131, %vm135
  %vm140 = vmand %vm132, %vm136
  %vm141 = vmand %vm133, %vm137
  %vm142 = vmand %vm134, %vm138
  %v143 = vsel %vm139, 1, 0
  %v144 = vsel %vm140, 1, 0
  %v145 = vsel %vm141, 1, 0
  %v146 = vsel %vm142, 1, 0
  %v147 = vcvt.s32.f32 %v143
  %v148 = vcvt.s32.f32 %v144
  %v149 = vcvt.s32.f32 %v145
  %v150 = vcvt.s32.f32 %v146
  %v151 = vadd.s32 %v75, 2
  %v152 = vadd.s32 %v76, 2
  %v153 = vadd.s32 %v77, 2
  %v154 = vadd.s32 %v78, 2
  %vm155 = vcmp.ge.s32.totalorder %v151, 0
  %vm156 = vcmp.ge.s32.totalorder %v152, 0
  %vm157 = vcmp.ge.s32.totalorder %v153, 0
  %vm158 = vcmp.ge.s32.totalorder %v154, 0
  %vm159 = vcmp.lt.s32.totalorder %v151, 16
  %vm160 = vcmp.lt.s32.totalorder %v152, 16
  %vm161 = vcmp.lt.s32.totalorder %v153, 16
  %vm162 = vcmp.lt.s32.totalorder %v154, 16
  %vm163 = vmand %vm155, %vm159
  %vm164 = vmand %vm156, %vm160
  %vm165 = vmand %vm157, %vm161
  %vm166 = vmand %vm158, %vm162
  %v167 = vsel %vm163, 1, 0
  %v168 = vsel %vm164, 1, 0
  %v169 = vsel %vm165, 1, 0
  %v170 = vsel %vm166, 1, 0
  %v171 = vcvt.s32.f32 %v167
  %v172 = vcvt.s32.f32 %v168
  %v173 = vcvt.s32.f32 %v169
  %v174 = vcvt.s32.f32 %v170
  %v175 = vld [vmem:[%s0] sm:$0xff]
  %v176 = vld [vmem:[%s0 + $0x8] sm:$0xff]
  %v177 = vld [vmem:[%s0 + $0x10] sm:$0xff]
  %v178 = vld [vmem:[%s0 + $0x18] sm:$0xff]
  %v179 = vld [vmem:[%s1] sm:$0x1]
  %v180 = vld [vmem:[%s2] sm:$0x1]
  %v181 = vld [vmem:[%s3] sm:$0xff]
  %v182 = vld [vmem:[%s3 + $0x8] sm:$0xff]
  %v183 = vld [vmem:[%s3 + $0x10] sm:$0xff]
  %v184 = vld [vmem:[%s3 + $0x18] sm:$0xff]
  %v185 = vld [vmem:[%s3 + $0x20] sm:$0xff]
  %v186 = vld [vmem:[%s3 + $0x28] sm:$0xff]
  %v187 = vld [vmem:[%s3 + $0x30] sm:$0xff]
  %v188 = vld [vmem:[%s3 + $0x38] sm:$0xff]
  %v189 = vld [vmem:[%s3 + $0x40] sm:$0xff]
  %v190 = vld [vmem:[%s3 + $0x48] sm:$0xff]
  %v191 = vld [vmem:[%s3 + $0x50] sm:$0xff]
  %v192 = vld [vmem:[%s3 + $0x58] sm:$0xff]
  %v193 = vld [vmem:[%s3 + $0x60] sm:$0xff]
  %v194 = vld [vmem:[%s3 + $0x68] sm:$0xff]
  %v195 = vld [vmem:[%s3 + $0x70] sm:$0xff]
  %v196 = vld [vmem:[%s3 + $0x78] sm:$0xff]
  %v197 = vld [vmem:[%s3 + $0x80] sm:$0xff]
  %v198 = vld [vmem:[%s3 + $0x88] sm:$0xff]
  %v199 = vld [vmem:[%s3 + $0x90] sm:$0xff]
  %v200 = vld [vmem:[%s3 + $0x98] sm:$0xff]
  %v201 = vld [vmem:[%s3 + $0xa0] sm:$0xff]
  %v202 = vld [vmem:[%s3 + $0xa8] sm:$0xff]
  %v203 = vld [vmem:[%s3 + $0xb0] sm:$0xff]
  %v204 = vld [vmem:[%s3 + $0xb8] sm:$0xff]
  %v205 = vld [vmem:[%s3 + $0xc0] sm:$0xff]
  %v206 = vld [vmem:[%s3 + $0xc8] sm:$0xff]
  %v207 = vld [vmem:[%s3 + $0xd0] sm:$0xff]
  %v208 = vld [vmem:[%s3 + $0xd8] sm:$0xff]
  %v209 = vld [vmem:[%s3 + $0xe0] sm:$0xff]
  %v210 = vld [vmem:[%s3 + $0xe8] sm:$0xff]
  %v211 = vld [vmem:[%s3 + $0xf0] sm:$0xff]
  %v212 = vld [vmem:[%s3 + $0xf8] sm:$0xff]
  %v213 = vld [vmem:[%s3 + $0x100] sm:$0xff]
  %v214 = vld [vmem:[%s3 + $0x108] sm:$0xff]
  %v215 = vld [vmem:[%s3 + $0x110] sm:$0xff]
  %v216 = vld [vmem:[%s3 + $0x118] sm:$0xff]
  %v217 = vld [vmem:[%s3 + $0x120] sm:$0xff]
  %v218 = vld [vmem:[%s3 + $0x128] sm:$0xff]
  %v219 = vld [vmem:[%s3 + $0x130] sm:$0xff]
  %v220 = vld [vmem:[%s3 + $0x138] sm:$0xff]
  %v221 = vld [vmem:[%s3 + $0x140] sm:$0xff]
  %v222 = vld [vmem:[%s3 + $0x148] sm:$0xff]
  %v223 = vld [vmem:[%s3 + $0x150] sm:$0xff]
  %v224 = vld [vmem:[%s3 + $0x158] sm:$0xff]
  %v225 = vld [vmem:[%s3 + $0x160] sm:$0xff]
  %v226 = vld [vmem:[%s3 + $0x168] sm:$0xff]
  %v227 = vld [vmem:[%s3 + $0x170] sm:$0xff]
  %v228 = vld [vmem:[%s3 + $0x178] sm:$0xff]
  %v229 = vld [vmem:[%s3 + $0x180] sm:$0xff]
  %v230 = vld [vmem:[%s3 + $0x188] sm:$0xff]
  %v231 = vld [vmem:[%s3 + $0x190] sm:$0xff]
  %v232 = vld [vmem:[%s3 + $0x198] sm:$0xff]
  %v233 = vld [vmem:[%s3 + $0x1a0] sm:$0xff]
  %v234 = vld [vmem:[%s3 + $0x1a8] sm:$0xff]
  %v235 = vld [vmem:[%s3 + $0x1b0] sm:$0xff]
  %v236 = vld [vmem:[%s3 + $0x1b8] sm:$0xff]
  %v237 = vld [vmem:[%s3 + $0x1c0] sm:$0xff]
  %v238 = vld [vmem:[%s3 + $0x1c8] sm:$0xff]
  %v239 = vld [vmem:[%s3 + $0x1d0] sm:$0xff]
  %v240 = vld [vmem:[%s3 + $0x1d8] sm:$0xff]
  %v241 = vld [vmem:[%s3 + $0x1e0] sm:$0xff]
  %v242 = vld [vmem:[%s3 + $0x1e8] sm:$0xff]
  %v243 = vld [vmem:[%s3 + $0x1f0] sm:$0xff]
  %v244 = vld [vmem:[%s3 + $0x1f8] sm:$0xff]
  %v245 = vld [vmem:[%s3 + $0x200] sm:$0xff]
  %v246 = vld [vmem:[%s3 + $0x208] sm:$0xff]
  %v247 = vld [vmem:[%s3 + $0x210] sm:$0xff]
  %v248 = vld [vmem:[%s3 + $0x218] sm:$0xff]
  %v249 = vld [vmem:[%s3 + $0x220] sm:$0xff]
  %v250 = vld [vmem:[%s3 + $0x228] sm:$0xff]
  %v251 = vld [vmem:[%s3 + $0x230] sm:$0xff]
  %v252 = vld [vmem:[%s3 + $0x238] sm:$0xff]
  %v253 = vld [vmem:[%s3 + $0x240] sm:$0xff]
  %v254 = vld [vmem:[%s3 + $0x248] sm:$0xff]
  %v255 = vld [vmem:[%s3 + $0x250] sm:$0xff]
  %v256 = vld [vmem:[%s3 + $0x258] sm:$0xff]
  %v257 = vld [vmem:[%s3 + $0x260] sm:$0xff]
  %v258 = vld [vmem:[%s3 + $0x268] sm:$0xff]
  %v259 = vld [vmem:[%s3 + $0x270] sm:$0xff]
  %v260 = vld [vmem:[%s3 + $0x278] sm:$0xff]
  %v261 = vadd.f32 %v175, %v176
  %v262 = vadd.f32 %v261, %v177
  %v263 = vadd.f32 %v262, %v178
  %v264 = vrot.slane %v263, 4
  %v265 = vadd.f32 %v263, %v264
  %v266 = vrot.slane %v265, 2
  %v267 = vadd.f32 %v265, %v266
  %v268 = vrot.slane %v267, 1
  %v269 = vadd.f32 %v267, %v268
  %270 = vrot.lane.b32.xlu0 %v269, 8
  %v271 = vpop.permute.xlu0 %270
  %v272 = vadd.f32 %v269, %v271
  %273 = vrot.lane.b32.xlu0 %v272, 16
  %v274 = vpop.permute.xlu0 %273
  %v275 = vadd.f32 %v272, %v274
  %276 = vrot.lane.b32.xlu0 %v275, 32
  %v277 = vpop.permute.xlu0 %276
  %v278 = vadd.f32 %v275, %v277
  %279 = vrot.lane.b32.xlu0 %v278, 64
  %v280 = vpop.permute.xlu0 %279
  %v281 = vadd.f32 %v278, %v280
  %v282 = vmul.f32 %v175, %v175
  %v283 = vmul.f32 %v176, %v176
  %v284 = vmul.f32 %v177, %v177
  %v285 = vmul.f32 %v178, %v178
  %v286 = vadd.f32 %v282, %v283
  %v287 = vadd.f32 %v286, %v284
  %v288 = vadd.f32 %v287, %v285
  %v289 = vrot.slane %v288, 4
  %v290 = vadd.f32 %v288, %v289
  %v291 = vrot.slane %v290, 2
  %v292 = vadd.f32 %v290, %v291
  %v293 = vrot.slane %v292, 1
  %v294 = vadd.f32 %v292, %v293
  %295 = vrot.lane.b32.xlu0 %v294, 8
  %v296 = vpop.permute.xlu0 %295
  %v297 = vadd.f32 %v294, %v296
  %298 = vrot.lane.b32.xlu0 %v297, 16
  %v299 = vpop.permute.xlu0 %298
  %v300 = vadd.f32 %v297, %v299
  %301 = vrot.lane.b32.xlu0 %v300, 32
  %v302 = vpop.permute.xlu0 %301
  %v303 = vadd.f32 %v300, %v302
  %304 = vrot.lane.b32.xlu0 %v303, 64
  %v305 = vpop.permute.xlu0 %304
  %v306 = vadd.f32 %v303, %v305
  %v307 = vmul.f32 %v281, 0.001953125
  %v308 = vmul.f32 %v306, 0.001953125
  %v309 = vmul.f32 %v307, %v307
  %v310 = vsub.f32 %v308, %v309
  %v311 = vadd.f32 %v310, 1e-05
  %v312 = vrsqrt.pop %v311
  %v313 = vmul.f32 %v179, %v312
  %v314 = vmul.f32 %v307, %v313
  %v315 = vsub.f32 %v180, %v314
  %v317 = vlaneseq
  %v318 = vshrl.u32 %v317, 7
  %v319 = vsub.s32 0, %v318
  %v320 = vrot.slane %v313, %v319
  %v322 = vmul.f32 %v175, %v320
  %v323 = vmul.f32 %v176, %v320
  %v324 = vmul.f32 %v177, %v320
  %v325 = vmul.f32 %v178, %v320
  %v327 = vlaneseq
  %v328 = vshrl.u32 %v327, 7
  %v329 = vsub.s32 0, %v328
  %v330 = vrot.slane %v315, %v329
  %v332 = vadd.f32 %v322, %v330
  %v333 = vadd.f32 %v323, %v330
  %v334 = vadd.f32 %v324, %v330
  %v335 = vadd.f32 %v325, %v330
  %v336 = vmax.f32 %v332, 0.0
  %v337 = vmax.f32 %v333, 0.0
  %v338 = vmax.f32 %v334, 0.0
  %v339 = vmax.f32 %v335, 0.0
  %v341 = vrot.slane %v339, 6
  %vm346 = vcmask 1041408
  %v347 = vrot.slane %v336, 6
  %v348 = vrot.slane %v337, 6
  %v349 = vsel %vm346, %v347, %v348
  %v350 = vrot.slane %v338, 6
  %v351 = vsel %vm346, %v348, %v350
  %v352 = vsel %vm346, %v350, %v341
  %v357 = vsel %vm346, %v341, %v347
  %v358 = vmul.f32 %v357, %v99
  %v359 = vmul.f32 %v349, %v100
  %v360 = vmul.f32 %v351, %v101
  %v361 = vmul.f32 %v352, %v102
  %v362 = vrot.slane %v339, 7
  %vm364 = vcmask 1040384
  %v365 = vrot.slane %v336, 7
  %v366 = vrot.slane %v337, 7
  %v367 = vsel %vm364, %v365, %v366
  %v368 = vrot.slane %v338, 7
  %v369 = vsel %vm364, %v366, %v368
  %v370 = vsel %vm364, %v368, %v362
  %v375 = vsel %vm364, %v362, %v365
  %v376 = vmul.f32 %v375, %v123
  %v377 = vmul.f32 %v367, %v124
  %v378 = vmul.f32 %v369, %v125
  %v379 = vmul.f32 %v370, %v126
  %vm380 = vcmask 1046528
  %v381 = vrot.slane %v336, 1
  %v382 = vrot.slane %v337, 1
  %v383 = vsel %vm380, %v381, %v382
  %v384 = vrot.slane %v338, 1
  %v385 = vsel %vm380, %v382, %v384
  %v386 = vrot.slane %v339, 1
  %v387 = vsel %vm380, %v384, %v386
  %v393 = vsel %vm380, %v386, %v381
  %v394 = vmul.f32 %v383, %v147
  %v395 = vmul.f32 %v385, %v148
  %v396 = vmul.f32 %v387, %v149
  %v397 = vmul.f32 %v393, %v150
  %vm398 = vcmask 1045504
  %v399 = vrot.slane %v336, 2
  %v400 = vrot.slane %v337, 2
  %v401 = vsel %vm398, %v399, %v400
  %v402 = vrot.slane %v338, 2
  %v403 = vsel %vm398, %v400, %v402
  %v404 = vrot.slane %v339, 2
  %v405 = vsel %vm398, %v402, %v404
  %v411 = vsel %vm398, %v404, %v399
  %v412 = vmul.f32 %v401, %v171
  %v413 = vmul.f32 %v403, %v172
  %v414 = vmul.f32 %v405, %v173
  %v415 = vmul.f32 %v411, %v174
  %416 = vmatprep.subr.mxu0 0.0
  %417 = vmatpush1.msra.mxu0 %v196
  %418 = vmatprep.subr.mxu0 0.0
  %419 = vmatpush1.msra.mxu0 %v195
  %420 = vmatprep.subr.mxu0 0.0
  %421 = vmatpush1.msra.mxu0 %v194
  %422 = vmatprep.subr.mxu0 0.0
  %423 = vmatpush1.msra.mxu0 %v193
  %424 = vmatprep.subr.mxu0 0.0
  %425 = vmatpush1.msra.mxu0 %v192
  %426 = vmatprep.subr.mxu0 0.0
  %427 = vmatpush1.msra.mxu0 %v191
  %428 = vmatprep.subr.mxu0 0.0
  %429 = vmatpush1.msra.mxu0 %v190
  %430 = vmatprep.subr.mxu0 0.0
  %431 = vmatpush1.msra.mxu0 %v189
  %432 = vmatprep.subr.mxu0 0.0
  %433 = vmatpush1.msra.mxu0 %v188
  %434 = vmatprep.subr.mxu0 0.0
  %435 = vmatpush1.msra.mxu0 %v187
  %436 = vmatprep.subr.mxu0 0.0
  %437 = vmatpush1.msra.mxu0 %v186
  %438 = vmatprep.subr.mxu0 0.0
  %439 = vmatpush1.msra.mxu0 %v185
  %440 = vmatprep.subr.mxu0 0.0
  %441 = vmatpush1.msra.mxu0 %v184
  %442 = vmatprep.subr.mxu0 0.0
  %443 = vmatpush1.msra.mxu0 %v183
  %444 = vmatprep.subr.mxu0 0.0
  %445 = vmatpush1.msra.mxu0 %v182
  %446 = vmatprep.subr.mxu0 0.0
  %447 = vmatpush1.msra.mxu0 %v181
  %448 = vmatprep.subr.mxu0 0.0
  %449 = vmatpush2.msra.mxu0 %v212
  %450 = vmatprep.subr.mxu0 0.0
  %451 = vmatpush2.msra.mxu0 %v211
  %452 = vmatprep.subr.mxu0 0.0
  %453 = vmatpush2.msra.mxu0 %v210
  %454 = vmatprep.subr.mxu0 0.0
  %455 = vmatpush2.msra.mxu0 %v209
  %456 = vmatprep.subr.mxu0 0.0
  %457 = vmatpush2.msra.mxu0 %v208
  %458 = vmatprep.subr.mxu0 0.0
  %459 = vmatpush2.msra.mxu0 %v207
  %460 = vmatprep.subr.mxu0 0.0
  %461 = vmatpush2.msra.mxu0 %v206
  %462 = vmatprep.subr.mxu0 0.0
  %463 = vmatpush2.msra.mxu0 %v205
  %464 = vmatprep.subr.mxu0 0.0
  %465 = vmatpush2.msra.mxu0 %v204
  %466 = vmatprep.subr.mxu0 0.0
  %467 = vmatpush2.msra.mxu0 %v203
  %468 = vmatprep.subr.mxu0 0.0
  %469 = vmatpush2.msra.mxu0 %v202
  %470 = vmatprep.subr.mxu0 0.0
  %471 = vmatpush2.msra.mxu0 %v201
  %472 = vmatprep.subr.mxu0 0.0
  %473 = vmatpush2.msra.mxu0 %v200
  %474 = vmatprep.subr.mxu0 0.0
  %475 = vmatpush2.msra.mxu0 %v199
  %476 = vmatprep.subr.mxu0 0.0
  %477 = vmatpush2.msra.mxu0 %v198
  %478 = vmatprep.subr.mxu0 0.0
  %479 = vmatpush2.msra.mxu0 %v197
  %480 = vmatprep.mubr.f32.mxu0 %v376
  %481 = vmatmul.mubr.f32.gmra.mxu0 %v358
  %v482 = vpop.f32.mrf.mxu0
  %v483 = vadd.f32 0.0, %v482
  %v484 = vpop.f32.mrf.mxu0
  %485 = vmatprep.mubr.f32.mxu0 %v377
  %486 = vmatmul.mubr.f32.gmra.mxu0 %v359
  %v487 = vpop.f32.mrf.mxu0
  %v488 = vadd.f32 0.0, %v487
  %v489 = vpop.f32.mrf.mxu0
  %490 = vmatprep.mubr.f32.mxu0 %v378
  %491 = vmatmul.mubr.f32.gmra.mxu0 %v360
  %v492 = vpop.f32.mrf.mxu0
  %v493 = vadd.f32 0.0, %v492
  %v494 = vpop.f32.mrf.mxu0
  %495 = vmatprep.mubr.f32.mxu0 %v379
  %496 = vmatmul.mubr.f32.gmra.mxu0 %v361
  %v497 = vpop.f32.mrf.mxu0
  %v498 = vadd.f32 0.0, %v497
  %v499 = vpop.f32.mrf.mxu0
  %500 = vdwg.mxu0
  %501 = vmatprep.subr.mxu0 0.0
  %502 = vmatpush1.msra.mxu0 %v228
  %503 = vmatprep.subr.mxu0 0.0
  %504 = vmatpush1.msra.mxu0 %v227
  %505 = vmatprep.subr.mxu0 0.0
  %506 = vmatpush1.msra.mxu0 %v226
  %507 = vmatprep.subr.mxu0 0.0
  %508 = vmatpush1.msra.mxu0 %v225
  %509 = vmatprep.subr.mxu0 0.0
  %510 = vmatpush1.msra.mxu0 %v224
  %511 = vmatprep.subr.mxu0 0.0
  %512 = vmatpush1.msra.mxu0 %v223
  %513 = vmatprep.subr.mxu0 0.0
  %514 = vmatpush1.msra.mxu0 %v222
  %515 = vmatprep.subr.mxu0 0.0
  %516 = vmatpush1.msra.mxu0 %v221
  %517 = vmatprep.subr.mxu0 0.0
  %518 = vmatpush1.msra.mxu0 %v220
  %519 = vmatprep.subr.mxu0 0.0
  %520 = vmatpush1.msra.mxu0 %v219
  %521 = vmatprep.subr.mxu0 0.0
  %522 = vmatpush1.msra.mxu0 %v218
  %523 = vmatprep.subr.mxu0 0.0
  %524 = vmatpush1.msra.mxu0 %v217
  %525 = vmatprep.subr.mxu0 0.0
  %526 = vmatpush1.msra.mxu0 %v216
  %527 = vmatprep.subr.mxu0 0.0
  %528 = vmatpush1.msra.mxu0 %v215
  %529 = vmatprep.subr.mxu0 0.0
  %530 = vmatpush1.msra.mxu0 %v214
  %531 = vmatprep.subr.mxu0 0.0
  %532 = vmatpush1.msra.mxu0 %v213
  %533 = vmatprep.subr.mxu0 0.0
  %534 = vmatpush2.msra.mxu0 %v244
  %535 = vmatprep.subr.mxu0 0.0
  %536 = vmatpush2.msra.mxu0 %v243
  %537 = vmatprep.subr.mxu0 0.0
  %538 = vmatpush2.msra.mxu0 %v242
  %539 = vmatprep.subr.mxu0 0.0
  %540 = vmatpush2.msra.mxu0 %v241
  %541 = vmatprep.subr.mxu0 0.0
  %542 = vmatpush2.msra.mxu0 %v240
  %543 = vmatprep.subr.mxu0 0.0
  %544 = vmatpush2.msra.mxu0 %v239
  %545 = vmatprep.subr.mxu0 0.0
  %546 = vmatpush2.msra.mxu0 %v238
  %547 = vmatprep.subr.mxu0 0.0
  %548 = vmatpush2.msra.mxu0 %v237
  %549 = vmatprep.subr.mxu0 0.0
  %550 = vmatpush2.msra.mxu0 %v236
  %551 = vmatprep.subr.mxu0 0.0
  %552 = vmatpush2.msra.mxu0 %v235
  %553 = vmatprep.subr.mxu0 0.0
  %554 = vmatpush2.msra.mxu0 %v234
  %555 = vmatprep.subr.mxu0 0.0
  %556 = vmatpush2.msra.mxu0 %v233
  %557 = vmatprep.subr.mxu0 0.0
  %558 = vmatpush2.msra.mxu0 %v232
  %559 = vmatprep.subr.mxu0 0.0
  %560 = vmatpush2.msra.mxu0 %v231
  %561 = vmatprep.subr.mxu0 0.0
  %562 = vmatpush2.msra.mxu0 %v230
  %563 = vmatprep.subr.mxu0 0.0
  %564 = vmatpush2.msra.mxu0 %v229
  %565 = vmatprep.mubr.f32.mxu0 %v394
  %566 = vmatmul.mubr.f32.gmra.mxu0 %v336
  %v567 = vpop.f32.mrf.mxu0
  %v568 = vadd.f32 %v483, %v567
  %v569 = vpop.f32.mrf.mxu0
  %570 = vmatprep.mubr.f32.mxu0 %v395
  %571 = vmatmul.mubr.f32.gmra.mxu0 %v337
  %v572 = vpop.f32.mrf.mxu0
  %v573 = vadd.f32 %v488, %v572
  %v574 = vpop.f32.mrf.mxu0
  %575 = vmatprep.mubr.f32.mxu0 %v396
  %576 = vmatmul.mubr.f32.gmra.mxu0 %v338
  %v577 = vpop.f32.mrf.mxu0
  %v578 = vadd.f32 %v493, %v577
  %v579 = vpop.f32.mrf.mxu0
  %580 = vmatprep.mubr.f32.mxu0 %v397
  %581 = vmatmul.mubr.f32.gmra.mxu0 %v339
  %v582 = vpop.f32.mrf.mxu0
  %v583 = vadd.f32 %v498, %v582
  %v584 = vpop.f32.mrf.mxu0
  %585 = vdwg.mxu0
  %586 = vmatprep.subr.mxu0 0.0
  %587 = vmatpush1.msra.mxu0 %v260
  %588 = vmatprep.subr.mxu0 0.0
  %589 = vmatpush1.msra.mxu0 %v259
  %590 = vmatprep.subr.mxu0 0.0
  %591 = vmatpush1.msra.mxu0 %v258
  %592 = vmatprep.subr.mxu0 0.0
  %593 = vmatpush1.msra.mxu0 %v257
  %594 = vmatprep.subr.mxu0 0.0
  %595 = vmatpush1.msra.mxu0 %v256
  %596 = vmatprep.subr.mxu0 0.0
  %597 = vmatpush1.msra.mxu0 %v255
  %598 = vmatprep.subr.mxu0 0.0
  %599 = vmatpush1.msra.mxu0 %v254
  %600 = vmatprep.subr.mxu0 0.0
  %601 = vmatpush1.msra.mxu0 %v253
  %602 = vmatprep.subr.mxu0 0.0
  %603 = vmatpush1.msra.mxu0 %v252
  %604 = vmatprep.subr.mxu0 0.0
  %605 = vmatpush1.msra.mxu0 %v251
  %606 = vmatprep.subr.mxu0 0.0
  %607 = vmatpush1.msra.mxu0 %v250
  %608 = vmatprep.subr.mxu0 0.0
  %609 = vmatpush1.msra.mxu0 %v249
  %610 = vmatprep.subr.mxu0 0.0
  %611 = vmatpush1.msra.mxu0 %v248
  %612 = vmatprep.subr.mxu0 0.0
  %613 = vmatpush1.msra.mxu0 %v247
  %614 = vmatprep.subr.mxu0 0.0
  %615 = vmatpush1.msra.mxu0 %v246
  %616 = vmatprep.subr.mxu0 0.0
  %617 = vmatpush1.msra.mxu0 %v245
  %618 = vmatprep.subr.mxu0 0.0
  %619 = vmatpush2.msra.mxu0 0.0
  %620 = vmatprep.subr.mxu0 0.0
  %621 = vmatpush2.msra.mxu0 0.0
  %622 = vmatprep.subr.mxu0 0.0
  %623 = vmatpush2.msra.mxu0 0.0
  %624 = vmatprep.subr.mxu0 0.0
  %625 = vmatpush2.msra.mxu0 0.0
  %626 = vmatprep.subr.mxu0 0.0
  %627 = vmatpush2.msra.mxu0 0.0
  %628 = vmatprep.subr.mxu0 0.0
  %629 = vmatpush2.msra.mxu0 0.0
  %630 = vmatprep.subr.mxu0 0.0
  %631 = vmatpush2.msra.mxu0 0.0
  %632 = vmatprep.subr.mxu0 0.0
  %633 = vmatpush2.msra.mxu0 0.0
  %634 = vmatprep.subr.mxu0 0.0
  %635 = vmatpush2.msra.mxu0 0.0
  %636 = vmatprep.subr.mxu0 0.0
  %637 = vmatpush2.msra.mxu0 0.0
  %638 = vmatprep.subr.mxu0 0.0
  %639 = vmatpush2.msra.mxu0 0.0
  %640 = vmatprep.subr.mxu0 0.0
  %641 = vmatpush2.msra.mxu0 0.0
  %642 = vmatprep.subr.mxu0 0.0
  %643 = vmatpush2.msra.mxu0 0.0
  %644 = vmatprep.subr.mxu0 0.0
  %645 = vmatpush2.msra.mxu0 0.0
  %646 = vmatprep.subr.mxu0 0.0
  %647 = vmatpush2.msra.mxu0 0.0
  %648 = vmatprep.subr.mxu0 0.0
  %649 = vmatpush2.msra.mxu0 0.0
  %650 = vmatprep.mubr.f32.mxu0 0.0
  %651 = vmatmul.mubr.f32.gmra.mxu0 %v412
  %v652 = vpop.f32.mrf.mxu0
  %v653 = vadd.f32 %v568, %v652
  %v654 = vpop.f32.mrf.mxu0
  %655 = vmatprep.mubr.f32.mxu0 0.0
  %656 = vmatmul.mubr.f32.gmra.mxu0 %v413
  %v657 = vpop.f32.mrf.mxu0
  %v658 = vadd.f32 %v573, %v657
  %v659 = vpop.f32.mrf.mxu0
  %660 = vmatprep.mubr.f32.mxu0 0.0
  %661 = vmatmul.mubr.f32.gmra.mxu0 %v414
  %v662 = vpop.f32.mrf.mxu0
  %v663 = vadd.f32 %v578, %v662
  %v664 = vpop.f32.mrf.mxu0
  %665 = vmatprep.mubr.f32.mxu0 0.0
  %666 = vmatmul.mubr.f32.gmra.mxu0 %v415
  %v667 = vpop.f32.mrf.mxu0
  %v668 = vadd.f32 %v583, %v667
  %v669 = vpop.f32.mrf.mxu0
  %670 = vdwg.mxu0
  %v671 = vld [vmem:[%s4] sm:$0x1]
  %v672 = vld [vmem:[%s5] sm:$0x1]
  %v673 = vld [vmem:[%s6] sm:$0xff]
  %v674 = vld [vmem:[%s6 + $0x8] sm:$0xff]
  %v675 = vld [vmem:[%s6 + $0x10] sm:$0xff]
  %v676 = vld [vmem:[%s6 + $0x18] sm:$0xff]
  %v677 = vld [vmem:[%s6 + $0x20] sm:$0xff]
  %v678 = vld [vmem:[%s6 + $0x28] sm:$0xff]
  %v679 = vld [vmem:[%s6 + $0x30] sm:$0xff]
  %v680 = vld [vmem:[%s6 + $0x38] sm:$0xff]
  %v681 = vld [vmem:[%s6 + $0x40] sm:$0xff]
  %v682 = vld [vmem:[%s6 + $0x48] sm:$0xff]
  %v683 = vld [vmem:[%s6 + $0x50] sm:$0xff]
  %v684 = vld [vmem:[%s6 + $0x58] sm:$0xff]
  %v685 = vld [vmem:[%s6 + $0x60] sm:$0xff]
  %v686 = vld [vmem:[%s6 + $0x68] sm:$0xff]
  %v687 = vld [vmem:[%s6 + $0x70] sm:$0xff]
  %v688 = vld [vmem:[%s6 + $0x78] sm:$0xff]
  %v689 = vld [vmem:[%s6 + $0x80] sm:$0xff]
  %v690 = vld [vmem:[%s6 + $0x88] sm:$0xff]
  %v691 = vld [vmem:[%s6 + $0x90] sm:$0xff]
  %v692 = vld [vmem:[%s6 + $0x98] sm:$0xff]
  %v693 = vld [vmem:[%s6 + $0xa0] sm:$0xff]
  %v694 = vld [vmem:[%s6 + $0xa8] sm:$0xff]
  %v695 = vld [vmem:[%s6 + $0xb0] sm:$0xff]
  %v696 = vld [vmem:[%s6 + $0xb8] sm:$0xff]
  %v697 = vld [vmem:[%s6 + $0xc0] sm:$0xff]
  %v698 = vld [vmem:[%s6 + $0xc8] sm:$0xff]
  %v699 = vld [vmem:[%s6 + $0xd0] sm:$0xff]
  %v700 = vld [vmem:[%s6 + $0xd8] sm:$0xff]
  %v701 = vld [vmem:[%s6 + $0xe0] sm:$0xff]
  %v702 = vld [vmem:[%s6 + $0xe8] sm:$0xff]
  %v703 = vld [vmem:[%s6 + $0xf0] sm:$0xff]
  %v704 = vld [vmem:[%s6 + $0xf8] sm:$0xff]
  %v705 = vld [vmem:[%s6 + $0x100] sm:$0xff]
  %v706 = vld [vmem:[%s6 + $0x108] sm:$0xff]
  %v707 = vld [vmem:[%s6 + $0x110] sm:$0xff]
  %v708 = vld [vmem:[%s6 + $0x118] sm:$0xff]
  %v709 = vld [vmem:[%s6 + $0x120] sm:$0xff]
  %v710 = vld [vmem:[%s6 + $0x128] sm:$0xff]
  %v711 = vld [vmem:[%s6 + $0x130] sm:$0xff]
  %v712 = vld [vmem:[%s6 + $0x138] sm:$0xff]
  %v713 = vld [vmem:[%s6 + $0x140] sm:$0xff]
  %v714 = vld [vmem:[%s6 + $0x148] sm:$0xff]
  %v715 = vld [vmem:[%s6 + $0x150] sm:$0xff]
  %v716 = vld [vmem:[%s6 + $0x158] sm:$0xff]
  %v717 = vld [vmem:[%s6 + $0x160] sm:$0xff]
  %v718 = vld [vmem:[%s6 + $0x168] sm:$0xff]
  %v719 = vld [vmem:[%s6 + $0x170] sm:$0xff]
  %v720 = vld [vmem:[%s6 + $0x178] sm:$0xff]
  %v721 = vld [vmem:[%s6 + $0x180] sm:$0xff]
  %v722 = vld [vmem:[%s6 + $0x188] sm:$0xff]
  %v723 = vld [vmem:[%s6 + $0x190] sm:$0xff]
  %v724 = vld [vmem:[%s6 + $0x198] sm:$0xff]
  %v725 = vld [vmem:[%s6 + $0x1a0] sm:$0xff]
  %v726 = vld [vmem:[%s6 + $0x1a8] sm:$0xff]
  %v727 = vld [vmem:[%s6 + $0x1b0] sm:$0xff]
  %v728 = vld [vmem:[%s6 + $0x1b8] sm:$0xff]
  %v729 = vld [vmem:[%s6 + $0x1c0] sm:$0xff]
  %v730 = vld [vmem:[%s6 + $0x1c8] sm:$0xff]
  %v731 = vld [vmem:[%s6 + $0x1d0] sm:$0xff]
  %v732 = vld [vmem:[%s6 + $0x1d8] sm:$0xff]
  %v733 = vld [vmem:[%s6 + $0x1e0] sm:$0xff]
  %v734 = vld [vmem:[%s6 + $0x1e8] sm:$0xff]
  %v735 = vld [vmem:[%s6 + $0x1f0] sm:$0xff]
  %v736 = vld [vmem:[%s6 + $0x1f8] sm:$0xff]
  %v737 = vld [vmem:[%s6 + $0x200] sm:$0xff]
  %v738 = vld [vmem:[%s6 + $0x208] sm:$0xff]
  %v739 = vld [vmem:[%s6 + $0x210] sm:$0xff]
  %v740 = vld [vmem:[%s6 + $0x218] sm:$0xff]
  %v741 = vld [vmem:[%s6 + $0x220] sm:$0xff]
  %v742 = vld [vmem:[%s6 + $0x228] sm:$0xff]
  %v743 = vld [vmem:[%s6 + $0x230] sm:$0xff]
  %v744 = vld [vmem:[%s6 + $0x238] sm:$0xff]
  %v745 = vld [vmem:[%s6 + $0x240] sm:$0xff]
  %v746 = vld [vmem:[%s6 + $0x248] sm:$0xff]
  %v747 = vld [vmem:[%s6 + $0x250] sm:$0xff]
  %v748 = vld [vmem:[%s6 + $0x258] sm:$0xff]
  %v749 = vld [vmem:[%s6 + $0x260] sm:$0xff]
  %v750 = vld [vmem:[%s6 + $0x268] sm:$0xff]
  %v751 = vld [vmem:[%s6 + $0x270] sm:$0xff]
  %v752 = vld [vmem:[%s6 + $0x278] sm:$0xff]
  %v753 = vadd.f32 %v653, %v658
  %v754 = vadd.f32 %v753, %v663
  %v755 = vadd.f32 %v754, %v668
  %v756 = vrot.slane %v755, 4
  %v757 = vadd.f32 %v755, %v756
  %v758 = vrot.slane %v757, 2
  %v759 = vadd.f32 %v757, %v758
  %v760 = vrot.slane %v759, 1
  %v761 = vadd.f32 %v759, %v760
  %762 = vrot.lane.b32.xlu0 %v761, 8
  %v763 = vpop.permute.xlu0 %762
  %v764 = vadd.f32 %v761, %v763
  %765 = vrot.lane.b32.xlu0 %v764, 16
  %v766 = vpop.permute.xlu0 %765
  %v767 = vadd.f32 %v764, %v766
  %768 = vrot.lane.b32.xlu0 %v767, 32
  %v769 = vpop.permute.xlu0 %768
  %v770 = vadd.f32 %v767, %v769
  %771 = vrot.lane.b32.xlu0 %v770, 64
  %v772 = vpop.permute.xlu0 %771
  %v773 = vadd.f32 %v770, %v772
  %v774 = vmul.f32 %v653, %v653
  %v775 = vmul.f32 %v658, %v658
  %v776 = vmul.f32 %v663, %v663
  %v777 = vmul.f32 %v668, %v668
  %v778 = vadd.f32 %v774, %v775
  %v779 = vadd.f32 %v778, %v776
  %v780 = vadd.f32 %v779, %v777
  %v781 = vrot.slane %v780, 4
  %v782 = vadd.f32 %v780, %v781
  %v783 = vrot.slane %v782, 2
  %v784 = vadd.f32 %v782, %v783
  %v785 = vrot.slane %v784, 1
  %v786 = vadd.f32 %v784, %v785
  %787 = vrot.lane.b32.xlu0 %v786, 8
  %v788 = vpop.permute.xlu0 %787
  %v789 = vadd.f32 %v786, %v788
  %790 = vrot.lane.b32.xlu0 %v789, 16
  %v791 = vpop.permute.xlu0 %790
  %v792 = vadd.f32 %v789, %v791
  %793 = vrot.lane.b32.xlu0 %v792, 32
  %v794 = vpop.permute.xlu0 %793
  %v795 = vadd.f32 %v792, %v794
  %796 = vrot.lane.b32.xlu0 %v795, 64
  %v797 = vpop.permute.xlu0 %796
  %v798 = vadd.f32 %v795, %v797
  %v799 = vmul.f32 %v773, 0.001953125
  %v800 = vmul.f32 %v798, 0.001953125
  %v801 = vmul.f32 %v799, %v799
  %v802 = vsub.f32 %v800, %v801
  %v803 = vadd.f32 %v802, 1e-05
  %v804 = vrsqrt.pop %v803
  %v805 = vmul.f32 %v671, %v804
  %v806 = vmul.f32 %v799, %v805
  %v807 = vsub.f32 %v672, %v806
  %v809 = vlaneseq
  %v810 = vshrl.u32 %v809, 7
  %v811 = vsub.s32 0, %v810
  %v812 = vrot.slane %v805, %v811
  %v814 = vmul.f32 %v653, %v812
  %v815 = vmul.f32 %v658, %v812
  %v816 = vmul.f32 %v663, %v812
  %v817 = vmul.f32 %v668, %v812
  %v819 = vlaneseq
  %v820 = vshrl.u32 %v819, 7
  %v821 = vsub.s32 0, %v820
  %v822 = vrot.slane %v807, %v821
  %v824 = vadd.f32 %v814, %v822
  %v825 = vadd.f32 %v815, %v822
  %v826 = vadd.f32 %v816, %v822
  %v827 = vadd.f32 %v817, %v822
  %v828 = vmax.f32 %v824, 0.0
  %v829 = vmax.f32 %v825, 0.0
  %v830 = vmax.f32 %v826, 0.0
  %v831 = vmax.f32 %v827, 0.0
  %v833 = vrot.slane %v831, 6
  %v838 = vrot.slane %v828, 6
  %v839 = vrot.slane %v829, 6
  %v840 = vsel %vm346, %v838, %v839
  %v841 = vrot.slane %v830, 6
  %v842 = vsel %vm346, %v839, %v841
  %v843 = vsel %vm346, %v841, %v833
  %v848 = vsel %vm346, %v833, %v838
  %v849 = vmul.f32 %v848, %v99
  %v850 = vmul.f32 %v840, %v100
  %v851 = vmul.f32 %v842, %v101
  %v852 = vmul.f32 %v843, %v102
  %v853 = vrot.slane %v831, 7
  %v855 = vrot.slane %v828, 7
  %v856 = vrot.slane %v829, 7
  %v857 = vsel %vm364, %v855, %v856
  %v858 = vrot.slane %v830, 7
  %v859 = vsel %vm364, %v856, %v858
  %v860 = vsel %vm364, %v858, %v853
  %v865 = vsel %vm364, %v853, %v855
  %v866 = vmul.f32 %v865, %v123
  %v867 = vmul.f32 %v857, %v124
  %v868 = vmul.f32 %v859, %v125
  %v869 = vmul.f32 %v860, %v126
  %v870 = vrot.slane %v828, 1
  %v871 = vrot.slane %v829, 1
  %v872 = vsel %vm380, %v870, %v871
  %v873 = vrot.slane %v830, 1
  %v874 = vsel %vm380, %v871, %v873
  %v875 = vrot.slane %v831, 1
  %v876 = vsel %vm380, %v873, %v875
  %v882 = vsel %vm380, %v875, %v870
  %v883 = vmul.f32 %v872, %v147
  %v884 = vmul.f32 %v874, %v148
  %v885 = vmul.f32 %v876, %v149
  %v886 = vmul.f32 %v882, %v150
  %v887 = vrot.slane %v828, 2
  %v888 = vrot.slane %v829, 2
  %v889 = vsel %vm398, %v887, %v888
  %v890 = vrot.slane %v830, 2
  %v891 = vsel %vm398, %v888, %v890
  %v892 = vrot.slane %v831, 2
  %v893 = vsel %vm398, %v890, %v892
  %v899 = vsel %vm398, %v892, %v887
  %v900 = vmul.f32 %v889, %v171
  %v901 = vmul.f32 %v891, %v172
  %v902 = vmul.f32 %v893, %v173
  %v903 = vmul.f32 %v899, %v174
  %904 = vmatprep.subr.mxu0 0.0
  %905 = vmatpush1.msra.mxu0 %v688
  %906 = vmatprep.subr.mxu0 0.0
  %907 = vmatpush1.msra.mxu0 %v687
  %908 = vmatprep.subr.mxu0 0.0
  %909 = vmatpush1.msra.mxu0 %v686
  %910 = vmatprep.subr.mxu0 0.0
  %911 = vmatpush1.msra.mxu0 %v685
  %912 = vmatprep.subr.mxu0 0.0
  %913 = vmatpush1.msra.mxu0 %v684
  %914 = vmatprep.subr.mxu0 0.0
  %915 = vmatpush1.msra.mxu0 %v683
  %916 = vmatprep.subr.mxu0 0.0
  %917 = vmatpush1.msra.mxu0 %v682
  %918 = vmatprep.subr.mxu0 0.0
  %919 = vmatpush1.msra.mxu0 %v681
  %920 = vmatprep.subr.mxu0 0.0
  %921 = vmatpush1.msra.mxu0 %v680
  %922 = vmatprep.subr.mxu0 0.0
  %923 = vmatpush1.msra.mxu0 %v679
  %924 = vmatprep.subr.mxu0 0.0
  %925 = vmatpush1.msra.mxu0 %v678
  %926 = vmatprep.subr.mxu0 0.0
  %927 = vmatpush1.msra.mxu0 %v677
  %928 = vmatprep.subr.mxu0 0.0
  %929 = vmatpush1.msra.mxu0 %v676
  %930 = vmatprep.subr.mxu0 0.0
  %931 = vmatpush1.msra.mxu0 %v675
  %932 = vmatprep.subr.mxu0 0.0
  %933 = vmatpush1.msra.mxu0 %v674
  %934 = vmatprep.subr.mxu0 0.0
  %935 = vmatpush1.msra.mxu0 %v673
  %936 = vmatprep.subr.mxu0 0.0
  %937 = vmatpush2.msra.mxu0 %v704
  %938 = vmatprep.subr.mxu0 0.0
  %939 = vmatpush2.msra.mxu0 %v703
  %940 = vmatprep.subr.mxu0 0.0
  %941 = vmatpush2.msra.mxu0 %v702
  %942 = vmatprep.subr.mxu0 0.0
  %943 = vmatpush2.msra.mxu0 %v701
  %944 = vmatprep.subr.mxu0 0.0
  %945 = vmatpush2.msra.mxu0 %v700
  %946 = vmatprep.subr.mxu0 0.0
  %947 = vmatpush2.msra.mxu0 %v699
  %948 = vmatprep.subr.mxu0 0.0
  %949 = vmatpush2.msra.mxu0 %v698
  %950 = vmatprep.subr.mxu0 0.0
  %951 = vmatpush2.msra.mxu0 %v697
  %952 = vmatprep.subr.mxu0 0.0
  %953 = vmatpush2.msra.mxu0 %v696
  %954 = vmatprep.subr.mxu0 0.0
  %955 = vmatpush2.msra.mxu0 %v695
  %956 = vmatprep.subr.mxu0 0.0
  %957 = vmatpush2.msra.mxu0 %v694
  %958 = vmatprep.subr.mxu0 0.0
  %959 = vmatpush2.msra.mxu0 %v693
  %960 = vmatprep.subr.mxu0 0.0
  %961 = vmatpush2.msra.mxu0 %v692
  %962 = vmatprep.subr.mxu0 0.0
  %963 = vmatpush2.msra.mxu0 %v691
  %964 = vmatprep.subr.mxu0 0.0
  %965 = vmatpush2.msra.mxu0 %v690
  %966 = vmatprep.subr.mxu0 0.0
  %967 = vmatpush2.msra.mxu0 %v689
  %968 = vmatprep.mubr.f32.mxu0 %v866
  %969 = vmatmul.mubr.f32.gmra.mxu0 %v849
  %v970 = vpop.f32.mrf.mxu0
  %v971 = vadd.f32 0.0, %v970
  %v972 = vpop.f32.mrf.mxu0
  %973 = vmatprep.mubr.f32.mxu0 %v867
  %974 = vmatmul.mubr.f32.gmra.mxu0 %v850
  %v975 = vpop.f32.mrf.mxu0
  %v976 = vadd.f32 0.0, %v975
  %v977 = vpop.f32.mrf.mxu0
  %978 = vmatprep.mubr.f32.mxu0 %v868
  %979 = vmatmul.mubr.f32.gmra.mxu0 %v851
  %v980 = vpop.f32.mrf.mxu0
  %v981 = vadd.f32 0.0, %v980
  %v982 = vpop.f32.mrf.mxu0
  %983 = vmatprep.mubr.f32.mxu0 %v869
  %984 = vmatmul.mubr.f32.gmra.mxu0 %v852
  %v985 = vpop.f32.mrf.mxu0
  %v986 = vadd.f32 0.0, %v985
  %v987 = vpop.f32.mrf.mxu0
  %988 = vdwg.mxu0
  %989 = vmatprep.subr.mxu0 0.0
  %990 = vmatpush1.msra.mxu0 %v720
  %991 = vmatprep.subr.mxu0 0.0
  %992 = vmatpush1.msra.mxu0 %v719
  %993 = vmatprep.subr.mxu0 0.0
  %994 = vmatpush1.msra.mxu0 %v718
  %995 = vmatprep.subr.mxu0 0.0
  %996 = vmatpush1.msra.mxu0 %v717
  %997 = vmatprep.subr.mxu0 0.0
  %998 = vmatpush1.msra.mxu0 %v716
  %999 = vmatprep.subr.mxu0 0.0
  %1000 = vmatpush1.msra.mxu0 %v715
  %1001 = vmatprep.subr.mxu0 0.0
  %1002 = vmatpush1.msra.mxu0 %v714
  %1003 = vmatprep.subr.mxu0 0.0
  %1004 = vmatpush1.msra.mxu0 %v713
  %1005 = vmatprep.subr.mxu0 0.0
  %1006 = vmatpush1.msra.mxu0 %v712
  %1007 = vmatprep.subr.mxu0 0.0
  %1008 = vmatpush1.msra.mxu0 %v711
  %1009 = vmatprep.subr.mxu0 0.0
  %1010 = vmatpush1.msra.mxu0 %v710
  %1011 = vmatprep.subr.mxu0 0.0
  %1012 = vmatpush1.msra.mxu0 %v709
  %1013 = vmatprep.subr.mxu0 0.0
  %1014 = vmatpush1.msra.mxu0 %v708
  %1015 = vmatprep.subr.mxu0 0.0
  %1016 = vmatpush1.msra.mxu0 %v707
  %1017 = vmatprep.subr.mxu0 0.0
  %1018 = vmatpush1.msra.mxu0 %v706
  %1019 = vmatprep.subr.mxu0 0.0
  %1020 = vmatpush1.msra.mxu0 %v705
  %1021 = vmatprep.subr.mxu0 0.0
  %1022 = vmatpush2.msra.mxu0 %v736
  %1023 = vmatprep.subr.mxu0 0.0
  %1024 = vmatpush2.msra.mxu0 %v735
  %1025 = vmatprep.subr.mxu0 0.0
  %1026 = vmatpush2.msra.mxu0 %v734
  %1027 = vmatprep.subr.mxu0 0.0
  %1028 = vmatpush2.msra.mxu0 %v733
  %1029 = vmatprep.subr.mxu0 0.0
  %1030 = vmatpush2.msra.mxu0 %v732
  %1031 = vmatprep.subr.mxu0 0.0
  %1032 = vmatpush2.msra.mxu0 %v731
  %1033 = vmatprep.subr.mxu0 0.0
  %1034 = vmatpush2.msra.mxu0 %v730
  %1035 = vmatprep.subr.mxu0 0.0
  %1036 = vmatpush2.msra.mxu0 %v729
  %1037 = vmatprep.subr.mxu0 0.0
  %1038 = vmatpush2.msra.mxu0 %v728
  %1039 = vmatprep.subr.mxu0 0.0
  %1040 = vmatpush2.msra.mxu0 %v727
  %1041 = vmatprep.subr.mxu0 0.0
  %1042 = vmatpush2.msra.mxu0 %v726
  %1043 = vmatprep.subr.mxu0 0.0
  %1044 = vmatpush2.msra.mxu0 %v725
  %1045 = vmatprep.subr.mxu0 0.0
  %1046 = vmatpush2.msra.mxu0 %v724
  %1047 = vmatprep.subr.mxu0 0.0
  %1048 = vmatpush2.msra.mxu0 %v723
  %1049 = vmatprep.subr.mxu0 0.0
  %1050 = vmatpush2.msra.mxu0 %v722
  %1051 = vmatprep.subr.mxu0 0.0
  %1052 = vmatpush2.msra.mxu0 %v721
  %1053 = vmatprep.mubr.f32.mxu0 %v883
  %1054 = vmatmul.mubr.f32.gmra.mxu0 %v828
  %v1055 = vpop.f32.mrf.mxu0
  %v1056 = vadd.f32 %v971, %v1055
  %v1057 = vpop.f32.mrf.mxu0
  %1058 = vmatprep.mubr.f32.mxu0 %v884
  %1059 = vmatmul.mubr.f32.gmra.mxu0 %v829
  %v1060 = vpop.f32.mrf.mxu0
  %v1061 = vadd.f32 %v976, %v1060
  %v1062 = vpop.f32.mrf.mxu0
  %1063 = vmatprep.mubr.f32.mxu0 %v885
  %1064 = vmatmul.mubr.f32.gmra.mxu0 %v830
  %v1065 = vpop.f32.mrf.mxu0
  %v1066 = vadd.f32 %v981, %v1065
  %v1067 = vpop.f32.mrf.mxu0
  %1068 = vmatprep.mubr.f32.mxu0 %v886
  %1069 = vmatmul.mubr.f32.gmra.mxu0 %v831
  %v1070 = vpop.f32.mrf.mxu0
  %v1071 = vadd.f32 %v986, %v1070
  %v1072 = vpop.f32.mrf.mxu0
  %1073 = vdwg.mxu0
  %1074 = vmatprep.subr.mxu0 0.0
  %1075 = vmatpush1.msra.mxu0 %v752
  %1076 = vmatprep.subr.mxu0 0.0
  %1077 = vmatpush1.msra.mxu0 %v751
  %1078 = vmatprep.subr.mxu0 0.0
  %1079 = vmatpush1.msra.mxu0 %v750
  %1080 = vmatprep.subr.mxu0 0.0
  %1081 = vmatpush1.msra.mxu0 %v749
  %1082 = vmatprep.subr.mxu0 0.0
  %1083 = vmatpush1.msra.mxu0 %v748
  %1084 = vmatprep.subr.mxu0 0.0
  %1085 = vmatpush1.msra.mxu0 %v747
  %1086 = vmatprep.subr.mxu0 0.0
  %1087 = vmatpush1.msra.mxu0 %v746
  %1088 = vmatprep.subr.mxu0 0.0
  %1089 = vmatpush1.msra.mxu0 %v745
  %1090 = vmatprep.subr.mxu0 0.0
  %1091 = vmatpush1.msra.mxu0 %v744
  %1092 = vmatprep.subr.mxu0 0.0
  %1093 = vmatpush1.msra.mxu0 %v743
  %1094 = vmatprep.subr.mxu0 0.0
  %1095 = vmatpush1.msra.mxu0 %v742
  %1096 = vmatprep.subr.mxu0 0.0
  %1097 = vmatpush1.msra.mxu0 %v741
  %1098 = vmatprep.subr.mxu0 0.0
  %1099 = vmatpush1.msra.mxu0 %v740
  %1100 = vmatprep.subr.mxu0 0.0
  %1101 = vmatpush1.msra.mxu0 %v739
  %1102 = vmatprep.subr.mxu0 0.0
  %1103 = vmatpush1.msra.mxu0 %v738
  %1104 = vmatprep.subr.mxu0 0.0
  %1105 = vmatpush1.msra.mxu0 %v737
  %1106 = vmatprep.subr.mxu0 0.0
  %1107 = vmatpush2.msra.mxu0 0.0
  %1108 = vmatprep.subr.mxu0 0.0
  %1109 = vmatpush2.msra.mxu0 0.0
  %1110 = vmatprep.subr.mxu0 0.0
  %1111 = vmatpush2.msra.mxu0 0.0
  %1112 = vmatprep.subr.mxu0 0.0
  %1113 = vmatpush2.msra.mxu0 0.0
  %1114 = vmatprep.subr.mxu0 0.0
  %1115 = vmatpush2.msra.mxu0 0.0
  %1116 = vmatprep.subr.mxu0 0.0
  %1117 = vmatpush2.msra.mxu0 0.0
  %1118 = vmatprep.subr.mxu0 0.0
  %1119 = vmatpush2.msra.mxu0 0.0
  %1120 = vmatprep.subr.mxu0 0.0
  %1121 = vmatpush2.msra.mxu0 0.0
  %1122 = vmatprep.subr.mxu0 0.0
  %1123 = vmatpush2.msra.mxu0 0.0
  %1124 = vmatprep.subr.mxu0 0.0
  %1125 = vmatpush2.msra.mxu0 0.0
  %1126 = vmatprep.subr.mxu0 0.0
  %1127 = vmatpush2.msra.mxu0 0.0
  %1128 = vmatprep.subr.mxu0 0.0
  %1129 = vmatpush2.msra.mxu0 0.0
  %1130 = vmatprep.subr.mxu0 0.0
  %1131 = vmatpush2.msra.mxu0 0.0
  %1132 = vmatprep.subr.mxu0 0.0
  %1133 = vmatpush2.msra.mxu0 0.0
  %1134 = vmatprep.subr.mxu0 0.0
  %1135 = vmatpush2.msra.mxu0 0.0
  %1136 = vmatprep.subr.mxu0 0.0
  %1137 = vmatpush2.msra.mxu0 0.0
  %1138 = vmatprep.mubr.f32.mxu0 0.0
  %1139 = vmatmul.mubr.f32.gmra.mxu0 %v900
  %v1140 = vpop.f32.mrf.mxu0
  %v1141 = vadd.f32 %v1056, %v1140
  %v1142 = vpop.f32.mrf.mxu0
  %1143 = vmatprep.mubr.f32.mxu0 0.0
  %1144 = vmatmul.mubr.f32.gmra.mxu0 %v901
  %v1145 = vpop.f32.mrf.mxu0
  %v1146 = vadd.f32 %v1061, %v1145
  %v1147 = vpop.f32.mrf.mxu0
  %1148 = vmatprep.mubr.f32.mxu0 0.0
  %1149 = vmatmul.mubr.f32.gmra.mxu0 %v902
  %v1150 = vpop.f32.mrf.mxu0
  %v1151 = vadd.f32 %v1066, %v1150
  %v1152 = vpop.f32.mrf.mxu0
  %1153 = vmatprep.mubr.f32.mxu0 0.0
  %1154 = vmatmul.mubr.f32.gmra.mxu0 %v903
  %v1155 = vpop.f32.mrf.mxu0
  %v1156 = vadd.f32 %v1071, %v1155
  %v1157 = vpop.f32.mrf.mxu0
  %1158 = vdwg.mxu0
  %1159 = vst [vmem:[%s7] sm:$0xff] %v1141
  %1160 = vst [vmem:[%s7 + $0x8] sm:$0xff] %v1146
  %1161 = vst [vmem:[%s7 + $0x10] sm:$0xff] %v1151
  %1162 = vst [vmem:[%s7 + $0x18] sm:$0xff] %v1156
  // Predicated region
  $region30: #{sep5_forward.1} parent=0 // pred_check
    _
  $region31: #{sep5_forward.1} parent=0 // pred_check_branch
    %1164 = sbr.rel (0) target = $region33
  $region32: #{sep5_forward.1} parent=0 // pred_region
    _
  $region33: #{sep5_forward.1} parent=0 // pred_fallthru
    _
  // Predicated region
  $region34: #{sep5_forward.1} parent=0 // pred_check
    _
  $region35: #{sep5_forward.1} parent=0 // pred_check_branch
    %1166 = sbr.rel (0) target = $region37
  $region36: #{sep5_forward.1} parent=0 // pred_region
    _
  $region37: #{sep5_forward.1} parent=0 // pred_fallthru
    _

</llo_original>
